<compile_context>
chip_gen: v6e
topology: v6e:2x2x1
jax: 0.10.0
libtpu: 0.0.40
codegen_flags: <defaults>
</compile_context>

<pallas_src>
import functools

import numpy as np
import jax
import jax.numpy as jnp
from jax import lax
from jax.experimental import pallas as pl
from jax.experimental.pallas import tpu as pltpu

# Module hyper-parameters (fixed by TextFeaturesArray(512, 16, 16, 512, 512)).
TEXT_DIM = 512           # input text-embedding dim
GRID_H = 16              # feature-array height
GRID_W = 16              # feature-array width
HW = GRID_H * GRID_W     # 256 grid cells (lane-dense last dim)
OUT_DIM = 512            # output channel dim (baseline: single Linear 512->512)
N_MAX = 8                # max text instances per image (padded rows masked out)
BB_TARGET = 16           # images per grid step (fits 32 MiB scoped VMEM on all gens;
                         # v6e could go to 32, v7x/v5e keep <=16)


def _text_feature_kernel(emb_ref, w_ref, b_ref, maskT_ref, out_ref, *, bb):
    """One grid step = bb batch elements.

    emb_ref  : (bb, N_MAX, TEXT_DIM)   padded per-image text embeddings
    w_ref    : (TEXT_DIM, OUT_DIM)     projection weight (grid-invariant)
    b_ref    : (1, OUT_DIM)            projection bias   (grid-invariant)
    maskT_ref: (bb, N_MAX, HW)         0/1 cell-coverage matrix, transposed
    out_ref  : (bb, OUT_DIM, HW)       channels-first flattened feature grid
    """
    # Single big projection matmul: M = bb*N_MAX (e.g. 128 at bb=16).
    emb2d = emb_ref[...].reshape(bb * N_MAX, TEXT_DIM)
    proj = jnp.dot(emb2d, w_ref[...],
                   preferred_element_type=jnp.float32) + b_ref[...]

    # Per-image splat, emitted transposed as (OUT_DIM, HW) so the output is
    # NCHW directly (no XLA transpose afterwards).  bb is a small static
    # constant -> unrolled Python loop of (512x8)@(8x256) matmuls.
    for i in range(bb):
        proj_i = proj[i * N_MAX:(i + 1) * N_MAX]          # (N_MAX, OUT_DIM)
        grid_t = lax.dot_general(
            proj_i, maskT_ref[i],
            dimension_numbers=(((0,), (0,)), ((), ())),   # proj_i^T @ mask_i
            preferred_element_type=jnp.float32)           # (OUT_DIM, HW)
        out_ref[i] = grid_t.astype(out_ref.dtype)


def text_features_array_pallas(emb, maskT, w, b, *, bb_target=BB_TARGET):
    """emb: (B, N_MAX, TEXT_DIM), maskT: (B, N_MAX, HW) -> (B, OUT_DIM, H, W)."""
    B = emb.shape[0]
    bb = max(1, min(bb_target, B))
    b_pad = pl.cdiv(B, bb) * bb
    if b_pad != B:
        pad = b_pad - B
        emb = jnp.pad(emb, ((0, pad), (0, 0), (0, 0)))
        maskT = jnp.pad(maskT, ((0, pad), (0, 0), (0, 0)))
    num_steps = b_pad // bb

    # Double-buffered blocks + grid-invariant W/b, with headroom.
    vmem_bytes = (2 * (bb * N_MAX * TEXT_DIM + bb * N_MAX * HW
                       + bb * OUT_DIM * HW) * 4
                  + 2 * (TEXT_DIM * OUT_DIM + OUT_DIM) * 4
                  + (4 << 20))
    vmem_limit = int(min(max(vmem_bytes, 32 << 20), 100 << 20))

    out_flat = pl.pallas_call(
        functools.partial(_text_feature_kernel, bb=bb),
        out_shape=jax.ShapeDtypeStruct((b_pad, OUT_DIM, HW), jnp.float32),
        grid_spec=pltpu.PrefetchScalarGridSpec(
            num_scalar_prefetch=0,
            grid=(num_steps,),
            in_specs=[
                pl.BlockSpec((bb, N_MAX, TEXT_DIM), lambda g: (g, 0, 0)),
                pl.BlockSpec((TEXT_DIM, OUT_DIM), lambda g: (0, 0)),
                pl.BlockSpec((1, OUT_DIM), lambda g: (0, 0)),
                pl.BlockSpec((bb, N_MAX, HW), lambda g: (g, 0, 0)),
            ],
            out_specs=pl.BlockSpec((bb, OUT_DIM, HW), lambda g: (g, 0, 0)),
        ),
        compiler_params=pltpu.CompilerParams(
            dimension_semantics=("parallel",),
            vmem_limit_bytes=vmem_limit),
    )(emb, w, b, maskT)

    # (B_pad, C, HW) -> (B, C, H, W): slice + pure reshape (no transpose).
    return out_flat[:B].reshape(B, OUT_DIM, GRID_H, GRID_W)


# ---------------------------------------------------------------------------
# Host-side glue: turn list[list[dict]] into padded dense tensors.
# Mask is packed transposed & lane-dense: (B, N_MAX, HW).
# ---------------------------------------------------------------------------
def pack_inputs(x, old_height, old_width):
    B = len(x)
    emb = np.zeros((B, N_MAX, TEXT_DIM), dtype=np.float32)
    maskT = np.zeros((B, N_MAX, HW), dtype=np.float32)
    for bi, items in enumerate(x):
        for ti, item in enumerate(items[:N_MAX]):
            emb[bi, ti] = np.asarray(item["embedding"], dtype=np.float32)
            x0, y0, x1, y1 = item["bbox"]
            gx0 = int(np.floor(x0 / old_width * GRID_W))
            gx1 = int(np.ceil(x1 / old_width * GRID_W))
            gy0 = int(np.floor(y0 / old_height * GRID_H))
            gy1 = int(np.ceil(y1 / old_height * GRID_H))
            gx0, gx1 = max(gx0, 0), min(max(gx1, gx0 + 1), GRID_W)
            gy0, gy1 = max(gy0, 0), min(max(gy1, gy0 + 1), GRID_H)
            cell = np.zeros((GRID_H, GRID_W), dtype=np.float32)
            cell[gy0:gy1, gx0:gx1] = 1.0
            maskT[bi, ti, :] = cell.reshape(-1)
    return jnp.asarray(emb), jnp.asarray(maskT)


class TextEncoderPallas:
    """Synthetic-weight JAX/Pallas equivalent of TextEncoder."""

    def __init__(self, key):
        kw, = jax.random.split(key, 1)
        # Deterministic init (baseline mode: one Linear TEXT_DIM -> OUT_DIM).
        self.w = (jax.random.normal(kw, (TEXT_DIM, OUT_DIM), dtype=jnp.float32)
                  * 0.02)
        self.b = jnp.zeros((1, OUT_DIM), dtype=jnp.float32)

    def __call__(self, x, old_height=None, old_width=None):
        old_height = 64 if old_height is None else old_height
        old_width = 64 if old_width is None else old_width
        emb, maskT = pack_inputs(x, old_height, old_width)
        return text_features_array_pallas(emb, maskT, self.w, self.b)


def _reference(emb, maskT, w, b):
    proj = jnp.einsum("bnd,de->bne", emb, w) + b[None]
    flat = jnp.einsum("bnh,bne->beh", maskT, proj)        # (B, C, HW)
    B = emb.shape[0]
    return flat.reshape(B, OUT_DIM, GRID_H, GRID_W)


if __name__ == "__main__":
    key = jax.random.PRNGKey(0)
    k_model, k_data, k_emb2, k_mask2 = jax.random.split(key, 4)

    # --- Test 1: list[list[dict]] path (batch=2 images, a few text boxes each)
    old_h, old_w = 64, 64
    embs = jax.random.normal(k_data, (2, 3, TEXT_DIM), dtype=jnp.float32)
    embs_np = np.asarray(embs)
    x = [
        [
            {"embedding": embs_np[0, 0], "bbox": (4.0, 4.0, 20.0, 12.0)},
            {"embedding": embs_np[0, 1], "bbox": (30.0, 30.0, 60.0, 50.0)},
        ],
        [
            {"embedding": embs_np[1, 0], "bbox": (0.0, 0.0, 64.0, 16.0)},
            {"embedding": embs_np[1, 1], "bbox": (10.0, 40.0, 24.0, 60.0)},
            {"embedding": embs_np[1, 2], "bbox": (40.0, 8.0, 56.0, 24.0)},
        ],
    ]

    encoder = TextEncoderPallas(k_model)
    out = jax.block_until_ready(encoder(x, old_h, old_w))

    emb_p, mask_p = pack_inputs(x, old_h, old_w)
    ref = jax.block_until_ready(_reference(emb_p, mask_p, encoder.w, encoder.b))
    assert out.shape == (2, OUT_DIM, GRID_H, GRID_W), out.shape
    np.testing.assert_allclose(np.asarray(out), np.asarray(ref),
                               rtol=1e-5, atol=1e-5)

    # --- Test 2: exercise the batched (bb>1) + batch-padding path directly.
    emb2 = jax.random.normal(k_emb2, (5, N_MAX, TEXT_DIM), dtype=jnp.float32)
    mask2 = (jax.random.uniform(k_mask2, (5, N_MAX, HW)) > 0.5).astype(
        jnp.float32)
    out2 = jax.block_until_ready(
        text_features_array_pallas(emb2, mask2, encoder.w, encoder.b,
                                   bb_target=4))
    ref2 = jax.block_until_ready(_reference(emb2, mask2, encoder.w, encoder.b))
    np.testing.assert_allclose(np.asarray(out2), np.asarray(ref2),
                               rtol=1e-5, atol=1e-5)

    print("KERNEL_OK")
</pallas_src>

<mosaic_0001>
module attributes {stable_mosaic.version = 11 : i64} {
  func.func @_text_feature_kernel(%arg0: i32, %arg1: memref<2x8x512xf32, #tpu.memory_space<vmem>>, %arg2: memref<512x512xf32, #tpu.memory_space<vmem>>, %arg3: memref<1x512xf32, #tpu.memory_space<vmem>>, %arg4: memref<2x8x256xf32, #tpu.memory_space<vmem>>, %arg5: memref<2x512x256xf32, #tpu.memory_space<vmem>>) attributes {dimension_semantics = [#tpu.dimension_semantics<parallel>], iteration_bounds = array<i64: 1>, scalar_prefetch = 0 : i64, scratch_operands = 0 : i64, tpu.core_type = #tpu.core_type<tc>, window_params = [{transform_indices = @transform_0, window_bounds = array<i64: 2, 8, 512>}, {pipeline_mode = #tpu.pipeline_mode<synchronous>, transform_indices = @transform_1, window_bounds = array<i64: 512, 512>}, {pipeline_mode = #tpu.pipeline_mode<synchronous>, transform_indices = @transform_2, window_bounds = array<i64: 1, 512>}, {transform_indices = @transform_3, window_bounds = array<i64: 2, 8, 256>}, {transform_indices = @transform_4, window_bounds = array<i64: 2, 512, 256>}]} {
    %c0 = arith.constant 0 : index
    %c0_0 = arith.constant 0 : index
    %c0_1 = arith.constant 0 : index
    %0 = vector.load %arg1[%c0, %c0_0, %c0_1] : memref<2x8x512xf32, #tpu.memory_space<vmem>>, vector<2x8x512xf32>
    %1 = vector.shape_cast %0 : vector<2x8x512xf32> to vector<16x512xf32>
    %c0_2 = arith.constant 0 : index
    %c0_3 = arith.constant 0 : index
    %2 = vector.load %arg2[%c0_2, %c0_3] : memref<512x512xf32, #tpu.memory_space<vmem>>, vector<512x512xf32>
    %cst = arith.constant dense<0.000000e+00> : vector<16x512xf32>
    %3 = tpu.matmul %1, %2, %cst {dimension_numbers = #tpu.dot_dimension_numbers<[1], [0], [0], [1], [0, 0, 1, 1], [], []>} : vector<16x512xf32>, vector<512x512xf32>, vector<16x512xf32> -> vector<16x512xf32>
    %c0_4 = arith.constant 0 : index
    %c0_5 = arith.constant 0 : index
    %4 = vector.load %arg3[%c0_4, %c0_5] : memref<1x512xf32, #tpu.memory_space<vmem>>, vector<1x512xf32>
    %5 = vector.broadcast %4 : vector<1x512xf32> to vector<16x512xf32>
    %6 = arith.addf %3, %5 : vector<16x512xf32>
    %7 = vector.extract_strided_slice %6 {offsets = [0, 0], sizes = [8, 512], strides = [1, 1]} : vector<16x512xf32> to vector<8x512xf32>
    %c0_6 = arith.constant 0 : index
    %c0_7 = arith.constant 0 : index
    %c0_8 = arith.constant 0 : index
    %8 = vector.load %arg4[%c0_6, %c0_7, %c0_8] : memref<2x8x256xf32, #tpu.memory_space<vmem>>, vector<1x8x256xf32>
    %9 = vector.shape_cast %8 : vector<1x8x256xf32> to vector<8x256xf32>
    %cst_9 = arith.constant dense<0.000000e+00> : vector<512x256xf32>
    %10 = tpu.matmul %7, %9, %cst_9 {dimension_numbers = #tpu.dot_dimension_numbers<[0], [0], [1], [1], [0, 1, 1, 1], [], []>} : vector<8x512xf32>, vector<8x256xf32>, vector<512x256xf32> -> vector<512x256xf32>
    %c0_10 = arith.constant 0 : index
    %c0_11 = arith.constant 0 : index
    %c0_12 = arith.constant 0 : index
    %11 = vector.load %arg5[%c0_10, %c0_11, %c0_12] : memref<2x512x256xf32, #tpu.memory_space<vmem>>, vector<1x512x256xf32>
    %12 = vector.shape_cast %11 : vector<1x512x256xf32> to vector<512x256xf32>
    %13 = vector.shape_cast %10 : vector<512x256xf32> to vector<1x512x256xf32>
    tpu.vector_store %arg5[%c0_10, %c0_11, %c0_12], %13 {strides = array<i32>} : memref<2x512x256xf32, #tpu.memory_space<vmem>>, vector<1x512x256xf32>,
    %14 = vector.extract_strided_slice %6 {offsets = [8, 0], sizes = [8, 512], strides = [1, 1]} : vector<16x512xf32> to vector<8x512xf32>
    %c1 = arith.constant 1 : index
    %c0_13 = arith.constant 0 : index
    %c0_14 = arith.constant 0 : index
    %15 = vector.load %arg4[%c1, %c0_13, %c0_14] : memref<2x8x256xf32, #tpu.memory_space<vmem>>, vector<1x8x256xf32>
    %16 = vector.shape_cast %15 : vector<1x8x256xf32> to vector<8x256xf32>
    %cst_15 = arith.constant dense<0.000000e+00> : vector<512x256xf32>
    %17 = tpu.matmul %14, %16, %cst_15 {dimension_numbers = #tpu.dot_dimension_numbers<[0], [0], [1], [1], [0, 1, 1, 1], [], []>} : vector<8x512xf32>, vector<8x256xf32>, vector<512x256xf32> -> vector<512x256xf32>
    %c1_16 = arith.constant 1 : index
    %c0_17 = arith.constant 0 : index
    %c0_18 = arith.constant 0 : index
    %18 = vector.load %arg5[%c1_16, %c0_17, %c0_18] : memref<2x512x256xf32, #tpu.memory_space<vmem>>, vector<1x512x256xf32>
    %19 = vector.shape_cast %18 : vector<1x512x256xf32> to vector<512x256xf32>
    %20 = vector.shape_cast %17 : vector<512x256xf32> to vector<1x512x256xf32>
    tpu.vector_store %arg5[%c1_16, %c0_17, %c0_18], %20 {strides = array<i32>} : memref<2x512x256xf32, #tpu.memory_space<vmem>>, vector<1x512x256xf32>,
    return
  }
  func.func @transform_0(%arg0: i32) -> (i32, i32, i32) {
    %c0_i32 = arith.constant 0 : i32
    %c0_i32_0 = arith.constant 0 : i32
    %c0_i32_1 = arith.constant 0 : i32
    return %arg0, %c0_i32, %c0_i32_0 : i32, i32, i32
  }
  func.func @transform_1(%arg0: i32) -> (i32, i32) {
    %c0_i32 = arith.constant 0 : i32
    %c0_i32_0 = arith.constant 0 : i32
    %c0_i32_1 = arith.constant 0 : i32
    return %c0_i32, %c0_i32_0 : i32, i32
  }
  func.func @transform_2(%arg0: i32) -> (i32, i32) {
    %c0_i32 = arith.constant 0 : i32
    %c0_i32_0 = arith.constant 0 : i32
    %c0_i32_1 = arith.constant 0 : i32
    return %c0_i32, %c0_i32_0 : i32, i32
  }
  func.func @transform_3(%arg0: i32) -> (i32, i32, i32) {
    %c0_i32 = arith.constant 0 : i32
    %c0_i32_0 = arith.constant 0 : i32
    %c0_i32_1 = arith.constant 0 : i32
    return %arg0, %c0_i32, %c0_i32_0 : i32, i32, i32
  }
  func.func @transform_4(%arg0: i32) -> (i32, i32, i32) {
    %c0_i32 = arith.constant 0 : i32
    %c0_i32_0 = arith.constant 0 : i32
    %c0_i32_1 = arith.constant 0 : i32
    return %arg0, %c0_i32, %c0_i32_0 : i32, i32, i32
  }
}

</mosaic_0001>

<llo_original>
// kernel: tpu_custom_call.1
$region0: #{tpu_custom_call.1}
  #allocation0 [shape = 'u32[]', space=smem, size = 0x4, offset = 0x4, fixed_abs, tag = 'smem constant byte address 0x4 - core index']
  #allocation1 [shape = 'u32[144,128]{1,0:T(1,128)}', space=vmem, size = 0x12000, scoped, tag = 'internal scratch']
  %s0 = inlined_call_operand.hbm [shape: f32[2,8,512], index: 0, kind: input, shape index: {}]
  %s1 = inlined_call_operand.hbm [shape: f32[512,512], index: 1, kind: input, shape index: {}]
  %s2 = inlined_call_operand.hbm [shape: f32[1,512], index: 2, kind: input, shape index: {}]
  %s3 = inlined_call_operand.hbm [shape: f32[2,8,256], index: 3, kind: input, shape index: {}]
  %s4 = inlined_call_operand.hbm [shape: f32[2,512,256], index: 4, kind: output, shape index: {}]
  %s5 = sld [smem:[#allocation0]]
  $region42: #{tpu_custom_call.1} parent=0
    _
  %s7 = ssub.s32 1, %s5
  %s8 = scalar_select 0, %s7, %s5
  $region1: #{tpu_custom_call.1} parent=0
    #allocation2 [shape = 'u8[32768]{0}', space=vmem, size = 0x8000, scoped, tag = 'input window, operand 0, single buffered']
    #allocation3 [shape = 's32[1]{0}', space=sflag, size = 0x4, scoped, tag = 'scoped memory for tpu_custom_call.1']
    #allocation4 [shape = 's32[1]{0}', space=sflag, size = 0x4, scoped, tag = 'scoped memory for tpu_custom_call.1']
    #allocation5 [shape = 'u8[1048576]{0}', space=vmem, size = 0x100000, scoped, tag = 'input window, operand 1, single buffered']
    #allocation6 [shape = 's32[1]{0}', space=sflag, size = 0x4, scoped, tag = 'scoped memory for tpu_custom_call.1']
    #allocation7 [shape = 'u8[2048]{0}', space=vmem, size = 0x800, scoped, tag = 'input window, operand 2, single buffered']
    #allocation8 [shape = 'u8[16384]{0}', space=vmem, size = 0x4000, scoped, tag = 'input window, operand 3, single buffered']
    #allocation9 [shape = 's32[1]{0}', space=sflag, size = 0x4, scoped, tag = 'scoped memory for tpu_custom_call.1']
    #allocation10 [shape = 'u8[1048576]{0}', space=vmem, size = 0x100000, scoped, tag = 'output window, operand 0, single buffered']
    %9 = vsyncpa [#allocation3], 0
    %10 = vsyncpa [#allocation6], 0
    %11 = vsyncpa [#allocation9], 0
    %12 = vsyncpa [#allocation4], 0
    // Predicated region
    $region2: #{tpu_custom_call.1} parent=1 // pred_check
      _
    $region3: #{tpu_custom_call.1} parent=1 // pred_check_branch
      %14 = sbr.rel (0) target = $region5
    $region4: #{tpu_custom_call.1} parent=1 // pred_region
      %s16 = ssub.s32 1024, 1024
      %17 = vsyncadd [#allocation3], %s16
      %s18 = sshll.u32 [#allocation2], 4
      %s19 = int_to_ptr.vmem [resolvable:$true] %s18
      %24 = dma.hbm_to_vmem [thread:$0]  %s0, 1024, %s19, [#allocation3], 512, 512, 32
    $region5: #{tpu_custom_call.1} parent=1 // pred_fallthru
      _
    // Predicated region
    $region6: #{tpu_custom_call.1} parent=1 // pred_check
      _
    $region7: #{tpu_custom_call.1} parent=1 // pred_check_branch
      %26 = sbr.rel (0) target = $region9
    $region8: #{tpu_custom_call.1} parent=1 // pred_region
      %s28 = ssub.s32 32768, 32768
      %29 = vsyncadd [#allocation6], %s28
      %s30 = sshll.u32 [#allocation5], 4
      %s31 = int_to_ptr.vmem [resolvable:$true] %s30
      %36 = dma.hbm_to_vmem [thread:$0]  %s1, 32768, %s31, [#allocation6], 512, 512, 32
    $region9: #{tpu_custom_call.1} parent=1 // pred_fallthru
      _
    // Predicated region
    $region10: #{tpu_custom_call.1} parent=1 // pred_check
      _
    $region11: #{tpu_custom_call.1} parent=1 // pred_check_branch
      %38 = sbr.rel (0) target = $region13
    $region12: #{tpu_custom_call.1} parent=1 // pred_region
      %s40 = ssub.s32 64, 64
      %41 = vsyncadd [#allocation6], %s40
      %s43 = sshll.u32 [#allocation7], 4
      %s44 = int_to_ptr.vmem [resolvable:$true] %s43
      %46 = dma.hbm_to_vmem [thread:$0]  %s2, 64, %s44, [#allocation6]
    $region13: #{tpu_custom_call.1} parent=1 // pred_fallthru
      _
    // Predicated region
    $region14: #{tpu_custom_call.1} parent=1 // pred_check
      _
    $region15: #{tpu_custom_call.1} parent=1 // pred_check_branch
      %48 = sbr.rel (0) target = $region17
    $region16: #{tpu_custom_call.1} parent=1 // pred_region
      %s50 = ssub.s32 512, 512
      %51 = vsyncadd [#allocation9], %s50
      %s52 = sshll.u32 [#allocation8], 4
      %s53 = int_to_ptr.vmem [resolvable:$true] %s52
      %58 = dma.hbm_to_vmem [thread:$0]  %s3, 512, %s53, [#allocation9], 256, 256, 16
    $region17: #{tpu_custom_call.1} parent=1 // pred_fallthru
      _
    // Predicated region
    $region18: #{tpu_custom_call.1} parent=1 // pred_check
      _
    $region19: #{tpu_custom_call.1} parent=1 // pred_check_branch
      %60 = sbr.rel (0) target = $region21
    $region20: #{tpu_custom_call.1} parent=1 // pred_region
      %61 = dma.done [#allocation3], 1024
    $region21: #{tpu_custom_call.1} parent=1 // pred_fallthru
      _
    // Predicated region
    $region22: #{tpu_custom_call.1} parent=1 // pred_check
      _
    $region23: #{tpu_custom_call.1} parent=1 // pred_check_branch
      %63 = sbr.rel (0) target = $region25
    $region24: #{tpu_custom_call.1} parent=1 // pred_region
      %64 = dma.done [#allocation6], 32768
    $region25: #{tpu_custom_call.1} parent=1 // pred_fallthru
      _
    // Predicated region
    $region26: #{tpu_custom_call.1} parent=1 // pred_check
      _
    $region27: #{tpu_custom_call.1} parent=1 // pred_check_branch
      %66 = sbr.rel (0) target = $region29
    $region28: #{tpu_custom_call.1} parent=1 // pred_region
      %67 = dma.done [#allocation6], 64
    $region29: #{tpu_custom_call.1} parent=1 // pred_fallthru
      _
    // Predicated region
    $region30: #{tpu_custom_call.1} parent=1 // pred_check
      _
    $region31: #{tpu_custom_call.1} parent=1 // pred_check_branch
      %69 = sbr.rel (0) target = $region33
    $region32: #{tpu_custom_call.1} parent=1 // pred_region
      %70 = dma.done [#allocation9], 512
    $region33: #{tpu_custom_call.1} parent=1 // pred_fallthru
      _
    %v71 = vld [vmem:[#allocation2] sm:$0xff]
    %v72 = vld [vmem:[#allocation2 + $0x8] sm:$0xff]
    %v73 = vld [vmem:[#allocation2 + $0x10] sm:$0xff]
    %v74 = vld [vmem:[#allocation2 + $0x18] sm:$0xff]
    %v75 = vld [vmem:[#allocation2 + $0x20] sm:$0xff]
    %v76 = vld [vmem:[#allocation2 + $0x28] sm:$0xff]
    %v77 = vld [vmem:[#allocation2 + $0x30] sm:$0xff]
    %v78 = vld [vmem:[#allocation2 + $0x38] sm:$0xff]
    %v79 = vld [vmem:[#allocation5] sm:$0xff]
    %v80 = vld [vmem:[#allocation5 + $0x8] sm:$0xff]
    %v81 = vld [vmem:[#allocation5 + $0x10] sm:$0xff]
    %v82 = vld [vmem:[#allocation5 + $0x18] sm:$0xff]
    %v83 = vld [vmem:[#allocation5 + $0x20] sm:$0xff]
    %v84 = vld [vmem:[#allocation5 + $0x28] sm:$0xff]
    %v85 = vld [vmem:[#allocation5 + $0x30] sm:$0xff]
    %v86 = vld [vmem:[#allocation5 + $0x38] sm:$0xff]
    %v87 = vld [vmem:[#allocation5 + $0x40] sm:$0xff]
    %v88 = vld [vmem:[#allocation5 + $0x48] sm:$0xff]
    %v89 = vld [vmem:[#allocation5 + $0x50] sm:$0xff]
    %v90 = vld [vmem:[#allocation5 + $0x58] sm:$0xff]
    %v91 = vld [vmem:[#allocation5 + $0x60] sm:$0xff]
    %v92 = vld [vmem:[#allocation5 + $0x68] sm:$0xff]
    %v93 = vld [vmem:[#allocation5 + $0x70] sm:$0xff]
    %v94 = vld [vmem:[#allocation5 + $0x78] sm:$0xff]
    %v95 = vld [vmem:[#allocation5 + $0x80] sm:$0xff]
    %v96 = vld [vmem:[#allocation5 + $0x88] sm:$0xff]
    %v97 = vld [vmem:[#allocation5 + $0x90] sm:$0xff]
    %v98 = vld [vmem:[#allocation5 + $0x98] sm:$0xff]
    %v99 = vld [vmem:[#allocation5 + $0xa0] sm:$0xff]
    %v100 = vld [vmem:[#allocation5 + $0xa8] sm:$0xff]
    %v101 = vld [vmem:[#allocation5 + $0xb0] sm:$0xff]
    %v102 = vld [vmem:[#allocation5 + $0xb8] sm:$0xff]
    %v103 = vld [vmem:[#allocation5 + $0xc0] sm:$0xff]
    %v104 = vld [vmem:[#allocation5 + $0xc8] sm:$0xff]
    %v105 = vld [vmem:[#allocation5 + $0xd0] sm:$0xff]
    %v106 = vld [vmem:[#allocation5 + $0xd8] sm:$0xff]
    %v107 = vld [vmem:[#allocation5 + $0xe0] sm:$0xff]
    %v108 = vld [vmem:[#allocation5 + $0xe8] sm:$0xff]
    %v109 = vld [vmem:[#allocation5 + $0xf0] sm:$0xff]
    %v110 = vld [vmem:[#allocation5 + $0xf8] sm:$0xff]
    %v111 = vld [vmem:[#allocation5 + $0x100] sm:$0xff]
    %v112 = vld [vmem:[#allocation5 + $0x108] sm:$0xff]
    %v113 = vld [vmem:[#allocation5 + $0x110] sm:$0xff]
    %v114 = vld [vmem:[#allocation5 + $0x118] sm:$0xff]
    %v115 = vld [vmem:[#allocation5 + $0x120] sm:$0xff]
    %v116 = vld [vmem:[#allocation5 + $0x128] sm:$0xff]
    %v117 = vld [vmem:[#allocation5 + $0x130] sm:$0xff]
    %v118 = vld [vmem:[#allocation5 + $0x138] sm:$0xff]
    %v119 = vld [vmem:[#allocation5 + $0x140] sm:$0xff]
    %v120 = vld [vmem:[#allocation5 + $0x148] sm:$0xff]
    %v121 = vld [vmem:[#allocation5 + $0x150] sm:$0xff]
    %v122 = vld [vmem:[#allocation5 + $0x158] sm:$0xff]
    %v123 = vld [vmem:[#allocation5 + $0x160] sm:$0xff]
    %v124 = vld [vmem:[#allocation5 + $0x168] sm:$0xff]
    %v125 = vld [vmem:[#allocation5 + $0x170] sm:$0xff]
    %v126 = vld [vmem:[#allocation5 + $0x178] sm:$0xff]
    %v127 = vld [vmem:[#allocation5 + $0x180] sm:$0xff]
    %v128 = vld [vmem:[#allocation5 + $0x188] sm:$0xff]
    %v129 = vld [vmem:[#allocation5 + $0x190] sm:$0xff]
    %v130 = vld [vmem:[#allocation5 + $0x198] sm:$0xff]
    %v131 = vld [vmem:[#allocation5 + $0x1a0] sm:$0xff]
    %v132 = vld [vmem:[#allocation5 + $0x1a8] sm:$0xff]
    %v133 = vld [vmem:[#allocation5 + $0x1b0] sm:$0xff]
    %v134 = vld [vmem:[#allocation5 + $0x1b8] sm:$0xff]
    %v135 = vld [vmem:[#allocation5 + $0x1c0] sm:$0xff]
    %v136 = vld [vmem:[#allocation5 + $0x1c8] sm:$0xff]
    %v137 = vld [vmem:[#allocation5 + $0x1d0] sm:$0xff]
    %v138 = vld [vmem:[#allocation5 + $0x1d8] sm:$0xff]
    %v139 = vld [vmem:[#allocation5 + $0x1e0] sm:$0xff]
    %v140 = vld [vmem:[#allocation5 + $0x1e8] sm:$0xff]
    %v141 = vld [vmem:[#allocation5 + $0x1f0] sm:$0xff]
    %v142 = vld [vmem:[#allocation5 + $0x1f8] sm:$0xff]
    %v143 = vld [vmem:[#allocation5 + $0x200] sm:$0xff]
    %v144 = vld [vmem:[#allocation5 + $0x208] sm:$0xff]
    %v145 = vld [vmem:[#allocation5 + $0x210] sm:$0xff]
    %v146 = vld [vmem:[#allocation5 + $0x218] sm:$0xff]
    %v147 = vld [vmem:[#allocation5 + $0x220] sm:$0xff]
    %v148 = vld [vmem:[#allocation5 + $0x228] sm:$0xff]
    %v149 = vld [vmem:[#allocation5 + $0x230] sm:$0xff]
    %v150 = vld [vmem:[#allocation5 + $0x238] sm:$0xff]
    %v151 = vld [vmem:[#allocation5 + $0x240] sm:$0xff]
    %v152 = vld [vmem:[#allocation5 + $0x248] sm:$0xff]
    %v153 = vld [vmem:[#allocation5 + $0x250] sm:$0xff]
    %v154 = vld [vmem:[#allocation5 + $0x258] sm:$0xff]
    %v155 = vld [vmem:[#allocation5 + $0x260] sm:$0xff]
    %v156 = vld [vmem:[#allocation5 + $0x268] sm:$0xff]
    %v157 = vld [vmem:[#allocation5 + $0x270] sm:$0xff]
    %v158 = vld [vmem:[#allocation5 + $0x278] sm:$0xff]
    %v159 = vld [vmem:[#allocation5 + $0x280] sm:$0xff]
    %v160 = vld [vmem:[#allocation5 + $0x288] sm:$0xff]
    %v161 = vld [vmem:[#allocation5 + $0x290] sm:$0xff]
    %v162 = vld [vmem:[#allocation5 + $0x298] sm:$0xff]
    %v163 = vld [vmem:[#allocation5 + $0x2a0] sm:$0xff]
    %v164 = vld [vmem:[#allocation5 + $0x2a8] sm:$0xff]
    %v165 = vld [vmem:[#allocation5 + $0x2b0] sm:$0xff]
    %v166 = vld [vmem:[#allocation5 + $0x2b8] sm:$0xff]
    %v167 = vld [vmem:[#allocation5 + $0x2c0] sm:$0xff]
    %v168 = vld [vmem:[#allocation5 + $0x2c8] sm:$0xff]
    %v169 = vld [vmem:[#allocation5 + $0x2d0] sm:$0xff]
    %v170 = vld [vmem:[#allocation5 + $0x2d8] sm:$0xff]
    %v171 = vld [vmem:[#allocation5 + $0x2e0] sm:$0xff]
    %v172 = vld [vmem:[#allocation5 + $0x2e8] sm:$0xff]
    %v173 = vld [vmem:[#allocation5 + $0x2f0] sm:$0xff]
    %v174 = vld [vmem:[#allocation5 + $0x2f8] sm:$0xff]
    %v175 = vld [vmem:[#allocation5 + $0x300] sm:$0xff]
    %v176 = vld [vmem:[#allocation5 + $0x308] sm:$0xff]
    %v177 = vld [vmem:[#allocation5 + $0x310] sm:$0xff]
    %v178 = vld [vmem:[#allocation5 + $0x318] sm:$0xff]
    %v179 = vld [vmem:[#allocation5 + $0x320] sm:$0xff]
    %v180 = vld [vmem:[#allocation5 + $0x328] sm:$0xff]
    %v181 = vld [vmem:[#allocation5 + $0x330] sm:$0xff]
    %v182 = vld [vmem:[#allocation5 + $0x338] sm:$0xff]
    %v183 = vld [vmem:[#allocation5 + $0x340] sm:$0xff]
    %v184 = vld [vmem:[#allocation5 + $0x348] sm:$0xff]
    %v185 = vld [vmem:[#allocation5 + $0x350] sm:$0xff]
    %v186 = vld [vmem:[#allocation5 + $0x358] sm:$0xff]
    %v187 = vld [vmem:[#allocation5 + $0x360] sm:$0xff]
    %v188 = vld [vmem:[#allocation5 + $0x368] sm:$0xff]
    %v189 = vld [vmem:[#allocation5 + $0x370] sm:$0xff]
    %v190 = vld [vmem:[#allocation5 + $0x378] sm:$0xff]
    %v191 = vld [vmem:[#allocation5 + $0x380] sm:$0xff]
    %v192 = vld [vmem:[#allocation5 + $0x388] sm:$0xff]
    %v193 = vld [vmem:[#allocation5 + $0x390] sm:$0xff]
    %v194 = vld [vmem:[#allocation5 + $0x398] sm:$0xff]
    %v195 = vld [vmem:[#allocation5 + $0x3a0] sm:$0xff]
    %v196 = vld [vmem:[#allocation5 + $0x3a8] sm:$0xff]
    %v197 = vld [vmem:[#allocation5 + $0x3b0] sm:$0xff]
    %v198 = vld [vmem:[#allocation5 + $0x3b8] sm:$0xff]
    %v199 = vld [vmem:[#allocation5 + $0x3c0] sm:$0xff]
    %v200 = vld [vmem:[#allocation5 + $0x3c8] sm:$0xff]
    %v201 = vld [vmem:[#allocation5 + $0x3d0] sm:$0xff]
    %v202 = vld [vmem:[#allocation5 + $0x3d8] sm:$0xff]
    %v203 = vld [vmem:[#allocation5 + $0x3e0] sm:$0xff]
    %v204 = vld [vmem:[#allocation5 + $0x3e8] sm:$0xff]
    %v205 = vld [vmem:[#allocation5 + $0x3f0] sm:$0xff]
    %v206 = vld [vmem:[#allocation5 + $0x3f8] sm:$0xff]
    %v207 = vld [vmem:[#allocation5 + $0x400] sm:$0xff]
    %v208 = vld [vmem:[#allocation5 + $0x408] sm:$0xff]
    %v209 = vld [vmem:[#allocation5 + $0x410] sm:$0xff]
    %v210 = vld [vmem:[#allocation5 + $0x418] sm:$0xff]
    %v211 = vld [vmem:[#allocation5 + $0x420] sm:$0xff]
    %v212 = vld [vmem:[#allocation5 + $0x428] sm:$0xff]
    %v213 = vld [vmem:[#allocation5 + $0x430] sm:$0xff]
    %v214 = vld [vmem:[#allocation5 + $0x438] sm:$0xff]
    %v215 = vld [vmem:[#allocation5 + $0x440] sm:$0xff]
    %v216 = vld [vmem:[#allocation5 + $0x448] sm:$0xff]
    %v217 = vld [vmem:[#allocation5 + $0x450] sm:$0xff]
    %v218 = vld [vmem:[#allocation5 + $0x458] sm:$0xff]
    %v219 = vld [vmem:[#allocation5 + $0x460] sm:$0xff]
    %v220 = vld [vmem:[#allocation5 + $0x468] sm:$0xff]
    %v221 = vld [vmem:[#allocation5 + $0x470] sm:$0xff]
    %v222 = vld [vmem:[#allocation5 + $0x478] sm:$0xff]
    %v223 = vld [vmem:[#allocation5 + $0x480] sm:$0xff]
    %v224 = vld [vmem:[#allocation5 + $0x488] sm:$0xff]
    %v225 = vld [vmem:[#allocation5 + $0x490] sm:$0xff]
    %v226 = vld [vmem:[#allocation5 + $0x498] sm:$0xff]
    %v227 = vld [vmem:[#allocation5 + $0x4a0] sm:$0xff]
    %v228 = vld [vmem:[#allocation5 + $0x4a8] sm:$0xff]
    %v229 = vld [vmem:[#allocation5 + $0x4b0] sm:$0xff]
    %v230 = vld [vmem:[#allocation5 + $0x4b8] sm:$0xff]
    %v231 = vld [vmem:[#allocation5 + $0x4c0] sm:$0xff]
    %v232 = vld [vmem:[#allocation5 + $0x4c8] sm:$0xff]
    %v233 = vld [vmem:[#allocation5 + $0x4d0] sm:$0xff]
    %v234 = vld [vmem:[#allocation5 + $0x4d8] sm:$0xff]
    %v235 = vld [vmem:[#allocation5 + $0x4e0] sm:$0xff]
    %v236 = vld [vmem:[#allocation5 + $0x4e8] sm:$0xff]
    %v237 = vld [vmem:[#allocation5 + $0x4f0] sm:$0xff]
    %v238 = vld [vmem:[#allocation5 + $0x4f8] sm:$0xff]
    %v239 = vld [vmem:[#allocation5 + $0x500] sm:$0xff]
    %v240 = vld [vmem:[#allocation5 + $0x508] sm:$0xff]
    %v241 = vld [vmem:[#allocation5 + $0x510] sm:$0xff]
    %v242 = vld [vmem:[#allocation5 + $0x518] sm:$0xff]
    %v243 = vld [vmem:[#allocation5 + $0x520] sm:$0xff]
    %v244 = vld [vmem:[#allocation5 + $0x528] sm:$0xff]
    %v245 = vld [vmem:[#allocation5 + $0x530] sm:$0xff]
    %v246 = vld [vmem:[#allocation5 + $0x538] sm:$0xff]
    %v247 = vld [vmem:[#allocation5 + $0x540] sm:$0xff]
    %v248 = vld [vmem:[#allocation5 + $0x548] sm:$0xff]
    %v249 = vld [vmem:[#allocation5 + $0x550] sm:$0xff]
    %v250 = vld [vmem:[#allocation5 + $0x558] sm:$0xff]
    %v251 = vld [vmem:[#allocation5 + $0x560] sm:$0xff]
    %v252 = vld [vmem:[#allocation5 + $0x568] sm:$0xff]
    %v253 = vld [vmem:[#allocation5 + $0x570] sm:$0xff]
    %v254 = vld [vmem:[#allocation5 + $0x578] sm:$0xff]
    %v255 = vld [vmem:[#allocation5 + $0x580] sm:$0xff]
    %v256 = vld [vmem:[#allocation5 + $0x588] sm:$0xff]
    %v257 = vld [vmem:[#allocation5 + $0x590] sm:$0xff]
    %v258 = vld [vmem:[#allocation5 + $0x598] sm:$0xff]
    %v259 = vld [vmem:[#allocation5 + $0x5a0] sm:$0xff]
    %v260 = vld [vmem:[#allocation5 + $0x5a8] sm:$0xff]
    %v261 = vld [vmem:[#allocation5 + $0x5b0] sm:$0xff]
    %v262 = vld [vmem:[#allocation5 + $0x5b8] sm:$0xff]
    %v263 = vld [vmem:[#allocation5 + $0x5c0] sm:$0xff]
    %v264 = vld [vmem:[#allocation5 + $0x5c8] sm:$0xff]
    %v265 = vld [vmem:[#allocation5 + $0x5d0] sm:$0xff]
    %v266 = vld [vmem:[#allocation5 + $0x5d8] sm:$0xff]
    %v267 = vld [vmem:[#allocation5 + $0x5e0] sm:$0xff]
    %v268 = vld [vmem:[#allocation5 + $0x5e8] sm:$0xff]
    %v269 = vld [vmem:[#allocation5 + $0x5f0] sm:$0xff]
    %v270 = vld [vmem:[#allocation5 + $0x5f8] sm:$0xff]
    %v271 = vld [vmem:[#allocation5 + $0x600] sm:$0xff]
    %v272 = vld [vmem:[#allocation5 + $0x608] sm:$0xff]
    %v273 = vld [vmem:[#allocation5 + $0x610] sm:$0xff]
    %v274 = vld [vmem:[#allocation5 + $0x618] sm:$0xff]
    %v275 = vld [vmem:[#allocation5 + $0x620] sm:$0xff]
    %v276 = vld [vmem:[#allocation5 + $0x628] sm:$0xff]
    %v277 = vld [vmem:[#allocation5 + $0x630] sm:$0xff]
    %v278 = vld [vmem:[#allocation5 + $0x638] sm:$0xff]
    %v279 = vld [vmem:[#allocation5 + $0x640] sm:$0xff]
    %v280 = vld [vmem:[#allocation5 + $0x648] sm:$0xff]
    %v281 = vld [vmem:[#allocation5 + $0x650] sm:$0xff]
    %v282 = vld [vmem:[#allocation5 + $0x658] sm:$0xff]
    %v283 = vld [vmem:[#allocation5 + $0x660] sm:$0xff]
    %v284 = vld [vmem:[#allocation5 + $0x668] sm:$0xff]
    %v285 = vld [vmem:[#allocation5 + $0x670] sm:$0xff]
    %v286 = vld [vmem:[#allocation5 + $0x678] sm:$0xff]
    %v287 = vld [vmem:[#allocation5 + $0x680] sm:$0xff]
    %v288 = vld [vmem:[#allocation5 + $0x688] sm:$0xff]
    %v289 = vld [vmem:[#allocation5 + $0x690] sm:$0xff]
    %v290 = vld [vmem:[#allocation5 + $0x698] sm:$0xff]
    %v291 = vld [vmem:[#allocation5 + $0x6a0] sm:$0xff]
    %v292 = vld [vmem:[#allocation5 + $0x6a8] sm:$0xff]
    %v293 = vld [vmem:[#allocation5 + $0x6b0] sm:$0xff]
    %v294 = vld [vmem:[#allocation5 + $0x6b8] sm:$0xff]
    %v295 = vld [vmem:[#allocation5 + $0x6c0] sm:$0xff]
    %v296 = vld [vmem:[#allocation5 + $0x6c8] sm:$0xff]
    %v297 = vld [vmem:[#allocation5 + $0x6d0] sm:$0xff]
    %v298 = vld [vmem:[#allocation5 + $0x6d8] sm:$0xff]
    %v299 = vld [vmem:[#allocation5 + $0x6e0] sm:$0xff]
    %v300 = vld [vmem:[#allocation5 + $0x6e8] sm:$0xff]
    %v301 = vld [vmem:[#allocation5 + $0x6f0] sm:$0xff]
    %v302 = vld [vmem:[#allocation5 + $0x6f8] sm:$0xff]
    %v303 = vld [vmem:[#allocation5 + $0x700] sm:$0xff]
    %v304 = vld [vmem:[#allocation5 + $0x708] sm:$0xff]
    %v305 = vld [vmem:[#allocation5 + $0x710] sm:$0xff]
    %v306 = vld [vmem:[#allocation5 + $0x718] sm:$0xff]
    %v307 = vld [vmem:[#allocation5 + $0x720] sm:$0xff]
    %v308 = vld [vmem:[#allocation5 + $0x728] sm:$0xff]
    %v309 = vld [vmem:[#allocation5 + $0x730] sm:$0xff]
    %v310 = vld [vmem:[#allocation5 + $0x738] sm:$0xff]
    %v311 = vld [vmem:[#allocation5 + $0x740] sm:$0xff]
    %v312 = vld [vmem:[#allocation5 + $0x748] sm:$0xff]
    %v313 = vld [vmem:[#allocation5 + $0x750] sm:$0xff]
    %v314 = vld [vmem:[#allocation5 + $0x758] sm:$0xff]
    %v315 = vld [vmem:[#allocation5 + $0x760] sm:$0xff]
    %v316 = vld [vmem:[#allocation5 + $0x768] sm:$0xff]
    %v317 = vld [vmem:[#allocation5 + $0x770] sm:$0xff]
    %v318 = vld [vmem:[#allocation5 + $0x778] sm:$0xff]
    %v319 = vld [vmem:[#allocation5 + $0x780] sm:$0xff]
    %v320 = vld [vmem:[#allocation5 + $0x788] sm:$0xff]
    %v321 = vld [vmem:[#allocation5 + $0x790] sm:$0xff]
    %v322 = vld [vmem:[#allocation5 + $0x798] sm:$0xff]
    %v323 = vld [vmem:[#allocation5 + $0x7a0] sm:$0xff]
    %v324 = vld [vmem:[#allocation5 + $0x7a8] sm:$0xff]
    %v325 = vld [vmem:[#allocation5 + $0x7b0] sm:$0xff]
    %v326 = vld [vmem:[#allocation5 + $0x7b8] sm:$0xff]
    %v327 = vld [vmem:[#allocation5 + $0x7c0] sm:$0xff]
    %v328 = vld [vmem:[#allocation5 + $0x7c8] sm:$0xff]
    %v329 = vld [vmem:[#allocation5 + $0x7d0] sm:$0xff]
    %v330 = vld [vmem:[#allocation5 + $0x7d8] sm:$0xff]
    %v331 = vld [vmem:[#allocation5 + $0x7e0] sm:$0xff]
    %v332 = vld [vmem:[#allocation5 + $0x7e8] sm:$0xff]
    %v333 = vld [vmem:[#allocation5 + $0x7f0] sm:$0xff]
    %v334 = vld [vmem:[#allocation5 + $0x7f8] sm:$0xff]
    %v335 = vld [vmem:[#allocation7] sm:$0xf]
    %v337 = vlaneseq
    %v338 = vshrl.u32 %v337, 7
    %v339 = vsub.s32 0, %v338
    %v340 = vrot.slane %v335, %v339
    %v341 = vlaneseq
    %v342 = vshrl.u32 %v341, 7
    %v343 = vsub.s32 1, %v342
    %v344 = vrot.slane %v335, %v343
    %v345 = vlaneseq
    %v346 = vshrl.u32 %v345, 7
    %v347 = vsub.s32 2, %v346
    %v348 = vrot.slane %v335, %v347
    %v349 = vlaneseq
    %v350 = vshrl.u32 %v349, 7
    %v351 = vsub.s32 3, %v350
    %v352 = vrot.slane %v335, %v351
    %357 = vmatprep.subr.mxu0 %v140
    %358 = vmatpush1.msra.mxu0 %v139
    %359 = vmatprep.subr.mxu0 %v136
    %360 = vmatpush1.msra.mxu0 %v135
    %361 = vmatprep.subr.mxu0 %v132
    %362 = vmatpush1.msra.mxu0 %v131
    %363 = vmatprep.subr.mxu0 %v128
    %364 = vmatpush1.msra.mxu0 %v127
    %365 = vmatprep.subr.mxu0 %v124
    %366 = vmatpush1.msra.mxu0 %v123
    %367 = vmatprep.subr.mxu0 %v120
    %368 = vmatpush1.msra.mxu0 %v119
    %369 = vmatprep.subr.mxu0 %v116
    %370 = vmatpush1.msra.mxu0 %v115
    %371 = vmatprep.subr.mxu0 %v112
    %372 = vmatpush1.msra.mxu0 %v111
    %373 = vmatprep.subr.mxu0 %v108
    %374 = vmatpush1.msra.mxu0 %v107
    %375 = vmatprep.subr.mxu0 %v104
    %376 = vmatpush1.msra.mxu0 %v103
    %377 = vmatprep.subr.mxu0 %v100
    %378 = vmatpush1.msra.mxu0 %v99
    %379 = vmatprep.subr.mxu0 %v96
    %380 = vmatpush1.msra.mxu0 %v95
    %381 = vmatprep.subr.mxu0 %v92
    %382 = vmatpush1.msra.mxu0 %v91
    %383 = vmatprep.subr.mxu0 %v88
    %384 = vmatpush1.msra.mxu0 %v87
    %385 = vmatprep.subr.mxu0 %v84
    %386 = vmatpush1.msra.mxu0 %v83
    %387 = vmatprep.subr.mxu0 %v80
    %388 = vmatpush1.msra.mxu0 %v79
    %389 = vmatprep.subr.mxu0 %v204
    %390 = vmatpush2.msra.mxu0 %v203
    %391 = vmatprep.subr.mxu0 %v200
    %392 = vmatpush2.msra.mxu0 %v199
    %393 = vmatprep.subr.mxu0 %v196
    %394 = vmatpush2.msra.mxu0 %v195
    %395 = vmatprep.subr.mxu0 %v192
    %396 = vmatpush2.msra.mxu0 %v191
    %397 = vmatprep.subr.mxu0 %v188
    %398 = vmatpush2.msra.mxu0 %v187
    %399 = vmatprep.subr.mxu0 %v184
    %400 = vmatpush2.msra.mxu0 %v183
    %401 = vmatprep.subr.mxu0 %v180
    %402 = vmatpush2.msra.mxu0 %v179
    %403 = vmatprep.subr.mxu0 %v176
    %404 = vmatpush2.msra.mxu0 %v175
    %405 = vmatprep.subr.mxu0 %v172
    %406 = vmatpush2.msra.mxu0 %v171
    %407 = vmatprep.subr.mxu0 %v168
    %408 = vmatpush2.msra.mxu0 %v167
    %409 = vmatprep.subr.mxu0 %v164
    %410 = vmatpush2.msra.mxu0 %v163
    %411 = vmatprep.subr.mxu0 %v160
    %412 = vmatpush2.msra.mxu0 %v159
    %413 = vmatprep.subr.mxu0 %v156
    %414 = vmatpush2.msra.mxu0 %v155
    %415 = vmatprep.subr.mxu0 %v152
    %416 = vmatpush2.msra.mxu0 %v151
    %417 = vmatprep.subr.mxu0 %v148
    %418 = vmatpush2.msra.mxu0 %v147
    %419 = vmatprep.subr.mxu0 %v144
    %420 = vmatpush2.msra.mxu0 %v143
    %421 = vmatprep.mubr.f32.mxu0 %v72
    %422 = vmatmul.mubr.f32.gmra.mxu0 %v71
    %v423 = vpop.f32.mrf.mxu0
    %v424 = vadd.f32 %v340, %v423
    %v425 = vpop.f32.mrf.mxu0
    %v426 = vadd.f32 %v344, %v425
    %427 = vmatprep.mubr.f32.mxu0 %v76
    %428 = vmatmul.mubr.f32.gmra.mxu0 %v75
    %v429 = vpop.f32.mrf.mxu0
    %v430 = vadd.f32 %v340, %v429
    %v431 = vpop.f32.mrf.mxu0
    %v432 = vadd.f32 %v344, %v431
    %433 = vdwg.mxu0
    %434 = vmatprep.subr.mxu0 %v268
    %435 = vmatpush1.msra.mxu0 %v267
    %436 = vmatprep.subr.mxu0 %v264
    %437 = vmatpush1.msra.mxu0 %v263
    %438 = vmatprep.subr.mxu0 %v260
    %439 = vmatpush1.msra.mxu0 %v259
    %440 = vmatprep.subr.mxu0 %v256
    %441 = vmatpush1.msra.mxu0 %v255
    %442 = vmatprep.subr.mxu0 %v252
    %443 = vmatpush1.msra.mxu0 %v251
    %444 = vmatprep.subr.mxu0 %v248
    %445 = vmatpush1.msra.mxu0 %v247
    %446 = vmatprep.subr.mxu0 %v244
    %447 = vmatpush1.msra.mxu0 %v243
    %448 = vmatprep.subr.mxu0 %v240
    %449 = vmatpush1.msra.mxu0 %v239
    %450 = vmatprep.subr.mxu0 %v236
    %451 = vmatpush1.msra.mxu0 %v235
    %452 = vmatprep.subr.mxu0 %v232
    %453 = vmatpush1.msra.mxu0 %v231
    %454 = vmatprep.subr.mxu0 %v228
    %455 = vmatpush1.msra.mxu0 %v227
    %456 = vmatprep.subr.mxu0 %v224
    %457 = vmatpush1.msra.mxu0 %v223
    %458 = vmatprep.subr.mxu0 %v220
    %459 = vmatpush1.msra.mxu0 %v219
    %460 = vmatprep.subr.mxu0 %v216
    %461 = vmatpush1.msra.mxu0 %v215
    %462 = vmatprep.subr.mxu0 %v212
    %463 = vmatpush1.msra.mxu0 %v211
    %464 = vmatprep.subr.mxu0 %v208
    %465 = vmatpush1.msra.mxu0 %v207
    %466 = vmatprep.subr.mxu0 %v332
    %467 = vmatpush2.msra.mxu0 %v331
    %468 = vmatprep.subr.mxu0 %v328
    %469 = vmatpush2.msra.mxu0 %v327
    %470 = vmatprep.subr.mxu0 %v324
    %471 = vmatpush2.msra.mxu0 %v323
    %472 = vmatprep.subr.mxu0 %v320
    %473 = vmatpush2.msra.mxu0 %v319
    %474 = vmatprep.subr.mxu0 %v316
    %475 = vmatpush2.msra.mxu0 %v315
    %476 = vmatprep.subr.mxu0 %v312
    %477 = vmatpush2.msra.mxu0 %v311
    %478 = vmatprep.subr.mxu0 %v308
    %479 = vmatpush2.msra.mxu0 %v307
    %480 = vmatprep.subr.mxu0 %v304
    %481 = vmatpush2.msra.mxu0 %v303
    %482 = vmatprep.subr.mxu0 %v300
    %483 = vmatpush2.msra.mxu0 %v299
    %484 = vmatprep.subr.mxu0 %v296
    %485 = vmatpush2.msra.mxu0 %v295
    %486 = vmatprep.subr.mxu0 %v292
    %487 = vmatpush2.msra.mxu0 %v291
    %488 = vmatprep.subr.mxu0 %v288
    %489 = vmatpush2.msra.mxu0 %v287
    %490 = vmatprep.subr.mxu0 %v284
    %491 = vmatpush2.msra.mxu0 %v283
    %492 = vmatprep.subr.mxu0 %v280
    %493 = vmatpush2.msra.mxu0 %v279
    %494 = vmatprep.subr.mxu0 %v276
    %495 = vmatpush2.msra.mxu0 %v275
    %496 = vmatprep.subr.mxu0 %v272
    %497 = vmatpush2.msra.mxu0 %v271
    %498 = vmatprep.mubr.f32.mxu0 %v74
    %499 = vmatmul.mubr.f32.gmra.mxu0 %v73
    %v500 = vpop.f32.mrf.mxu0
    %v501 = vadd.f32 %v424, %v500
    %v502 = vpop.f32.mrf.mxu0
    %v503 = vadd.f32 %v426, %v502
    %504 = vmatprep.mubr.f32.mxu0 %v78
    %505 = vmatmul.mubr.f32.gmra.mxu0 %v77
    %v506 = vpop.f32.mrf.mxu0
    %v507 = vadd.f32 %v430, %v506
    %v508 = vpop.f32.mrf.mxu0
    %v509 = vadd.f32 %v432, %v508
    %510 = vdwg.mxu0
    %511 = vmatprep.subr.mxu0 %v142
    %512 = vmatpush1.msra.mxu0 %v141
    %513 = vmatprep.subr.mxu0 %v138
    %514 = vmatpush1.msra.mxu0 %v137
    %515 = vmatprep.subr.mxu0 %v134
    %516 = vmatpush1.msra.mxu0 %v133
    %517 = vmatprep.subr.mxu0 %v130
    %518 = vmatpush1.msra.mxu0 %v129
    %519 = vmatprep.subr.mxu0 %v126
    %520 = vmatpush1.msra.mxu0 %v125
    %521 = vmatprep.subr.mxu0 %v122
    %522 = vmatpush1.msra.mxu0 %v121
    %523 = vmatprep.subr.mxu0 %v118
    %524 = vmatpush1.msra.mxu0 %v117
    %525 = vmatprep.subr.mxu0 %v114
    %526 = vmatpush1.msra.mxu0 %v113
    %527 = vmatprep.subr.mxu0 %v110
    %528 = vmatpush1.msra.mxu0 %v109
    %529 = vmatprep.subr.mxu0 %v106
    %530 = vmatpush1.msra.mxu0 %v105
    %531 = vmatprep.subr.mxu0 %v102
    %532 = vmatpush1.msra.mxu0 %v101
    %533 = vmatprep.subr.mxu0 %v98
    %534 = vmatpush1.msra.mxu0 %v97
    %535 = vmatprep.subr.mxu0 %v94
    %536 = vmatpush1.msra.mxu0 %v93
    %537 = vmatprep.subr.mxu0 %v90
    %538 = vmatpush1.msra.mxu0 %v89
    %539 = vmatprep.subr.mxu0 %v86
    %540 = vmatpush1.msra.mxu0 %v85
    %541 = vmatprep.subr.mxu0 %v82
    %542 = vmatpush1.msra.mxu0 %v81
    %543 = vmatprep.subr.mxu0 %v206
    %544 = vmatpush2.msra.mxu0 %v205
    %545 = vmatprep.subr.mxu0 %v202
    %546 = vmatpush2.msra.mxu0 %v201
    %547 = vmatprep.subr.mxu0 %v198
    %548 = vmatpush2.msra.mxu0 %v197
    %549 = vmatprep.subr.mxu0 %v194
    %550 = vmatpush2.msra.mxu0 %v193
    %551 = vmatprep.subr.mxu0 %v190
    %552 = vmatpush2.msra.mxu0 %v189
    %553 = vmatprep.subr.mxu0 %v186
    %554 = vmatpush2.msra.mxu0 %v185
    %555 = vmatprep.subr.mxu0 %v182
    %556 = vmatpush2.msra.mxu0 %v181
    %557 = vmatprep.subr.mxu0 %v178
    %558 = vmatpush2.msra.mxu0 %v177
    %559 = vmatprep.subr.mxu0 %v174
    %560 = vmatpush2.msra.mxu0 %v173
    %561 = vmatprep.subr.mxu0 %v170
    %562 = vmatpush2.msra.mxu0 %v169
    %563 = vmatprep.subr.mxu0 %v166
    %564 = vmatpush2.msra.mxu0 %v165
    %565 = vmatprep.subr.mxu0 %v162
    %566 = vmatpush2.msra.mxu0 %v161
    %567 = vmatprep.subr.mxu0 %v158
    %568 = vmatpush2.msra.mxu0 %v157
    %569 = vmatprep.subr.mxu0 %v154
    %570 = vmatpush2.msra.mxu0 %v153
    %571 = vmatprep.subr.mxu0 %v150
    %572 = vmatpush2.msra.mxu0 %v149
    %573 = vmatprep.subr.mxu0 %v146
    %574 = vmatpush2.msra.mxu0 %v145
    %575 = vmatprep.mubr.f32.mxu0 %v72
    %576 = vmatmul.mubr.f32.gmra.mxu0 %v71
    %v577 = vpop.f32.mrf.mxu0
    %v578 = vadd.f32 %v348, %v577
    %v579 = vpop.f32.mrf.mxu0
    %v580 = vadd.f32 %v352, %v579
    %581 = vmatprep.mubr.f32.mxu0 %v76
    %582 = vmatmul.mubr.f32.gmra.mxu0 %v75
    %v583 = vpop.f32.mrf.mxu0
    %v584 = vadd.f32 %v348, %v583
    %v585 = vpop.f32.mrf.mxu0
    %v586 = vadd.f32 %v352, %v585
    %587 = vdwg.mxu0
    %588 = vmatprep.subr.mxu0 %v270
    %589 = vmatpush1.msra.mxu0 %v269
    %590 = vmatprep.subr.mxu0 %v266
    %591 = vmatpush1.msra.mxu0 %v265
    %592 = vmatprep.subr.mxu0 %v262
    %593 = vmatpush1.msra.mxu0 %v261
    %594 = vmatprep.subr.mxu0 %v258
    %595 = vmatpush1.msra.mxu0 %v257
    %596 = vmatprep.subr.mxu0 %v254
    %597 = vmatpush1.msra.mxu0 %v253
    %598 = vmatprep.subr.mxu0 %v250
    %599 = vmatpush1.msra.mxu0 %v249
    %600 = vmatprep.subr.mxu0 %v246
    %601 = vmatpush1.msra.mxu0 %v245
    %602 = vmatprep.subr.mxu0 %v242
    %603 = vmatpush1.msra.mxu0 %v241
    %604 = vmatprep.subr.mxu0 %v238
    %605 = vmatpush1.msra.mxu0 %v237
    %606 = vmatprep.subr.mxu0 %v234
    %607 = vmatpush1.msra.mxu0 %v233
    %608 = vmatprep.subr.mxu0 %v230
    %609 = vmatpush1.msra.mxu0 %v229
    %610 = vmatprep.subr.mxu0 %v226
    %611 = vmatpush1.msra.mxu0 %v225
    %612 = vmatprep.subr.mxu0 %v222
    %613 = vmatpush1.msra.mxu0 %v221
    %614 = vmatprep.subr.mxu0 %v218
    %615 = vmatpush1.msra.mxu0 %v217
    %616 = vmatprep.subr.mxu0 %v214
    %617 = vmatpush1.msra.mxu0 %v213
    %618 = vmatprep.subr.mxu0 %v210
    %619 = vmatpush1.msra.mxu0 %v209
    %620 = vmatprep.subr.mxu0 %v334
    %621 = vmatpush2.msra.mxu0 %v333
    %622 = vmatprep.subr.mxu0 %v330
    %623 = vmatpush2.msra.mxu0 %v329
    %624 = vmatprep.subr.mxu0 %v326
    %625 = vmatpush2.msra.mxu0 %v325
    %626 = vmatprep.subr.mxu0 %v322
    %627 = vmatpush2.msra.mxu0 %v321
    %628 = vmatprep.subr.mxu0 %v318
    %629 = vmatpush2.msra.mxu0 %v317
    %630 = vmatprep.subr.mxu0 %v314
    %631 = vmatpush2.msra.mxu0 %v313
    %632 = vmatprep.subr.mxu0 %v310
    %633 = vmatpush2.msra.mxu0 %v309
    %634 = vmatprep.subr.mxu0 %v306
    %635 = vmatpush2.msra.mxu0 %v305
    %636 = vmatprep.subr.mxu0 %v302
    %637 = vmatpush2.msra.mxu0 %v301
    %638 = vmatprep.subr.mxu0 %v298
    %639 = vmatpush2.msra.mxu0 %v297
    %640 = vmatprep.subr.mxu0 %v294
    %641 = vmatpush2.msra.mxu0 %v293
    %642 = vmatprep.subr.mxu0 %v290
    %643 = vmatpush2.msra.mxu0 %v289
    %644 = vmatprep.subr.mxu0 %v286
    %645 = vmatpush2.msra.mxu0 %v285
    %646 = vmatprep.subr.mxu0 %v282
    %647 = vmatpush2.msra.mxu0 %v281
    %648 = vmatprep.subr.mxu0 %v278
    %649 = vmatpush2.msra.mxu0 %v277
    %650 = vmatprep.subr.mxu0 %v274
    %651 = vmatpush2.msra.mxu0 %v273
    %652 = vmatprep.mubr.f32.mxu0 %v74
    %653 = vmatmul.mubr.f32.gmra.mxu0 %v73
    %v654 = vpop.f32.mrf.mxu0
    %v655 = vadd.f32 %v578, %v654
    %v656 = vpop.f32.mrf.mxu0
    %v657 = vadd.f32 %v580, %v656
    %658 = vmatprep.mubr.f32.mxu0 %v78
    %659 = vmatmul.mubr.f32.gmra.mxu0 %v77
    %v660 = vpop.f32.mrf.mxu0
    %v661 = vadd.f32 %v584, %v660
    %v662 = vpop.f32.mrf.mxu0
    %v663 = vadd.f32 %v586, %v662
    %664 = vdwg.mxu0
    %v665 = vld [vmem:[#allocation8] sm:$0xff]
    %v666 = vld [vmem:[#allocation8 + $0x8] sm:$0xff]
    %667 = vxpose.xlu0.b32.start [1/16] %v501, 128
    %668 = vxpose.xlu0.b32.cont [2/16] 0.0, 128
    %669 = vxpose.xlu0.b32.cont [3/16] 0.0, 128
    %670 = vxpose.xlu0.b32.cont [4/16] 0.0, 128
    %671 = vxpose.xlu0.b32.cont [5/16] 0.0, 128
    %672 = vxpose.xlu0.b32.cont [6/16] 0.0, 128
    %673 = vxpose.xlu0.b32.cont [7/16] 0.0, 128
    %674 = vxpose.xlu0.b32.cont [8/16] 0.0, 128
    %675 = vxpose.xlu0.b32.cont [9/16] 0.0, 128
    %676 = vxpose.xlu0.b32.cont [10/16] 0.0, 128
    %677 = vxpose.xlu0.b32.cont [11/16] 0.0, 128
    %678 = vxpose.xlu0.b32.cont [12/16] 0.0, 128
    %679 = vxpose.xlu0.b32.cont [13/16] 0.0, 128
    %680 = vxpose.xlu0.b32.cont [14/16] 0.0, 128
    %681 = vxpose.xlu0.b32.cont [15/16] 0.0, 128
    %682 = vxpose.xlu0.b32.end [16/16] 0.0, 128
    %v683 = vpop.trf.xlu0
    %v684 = vpop.trf.xlu0
    %v685 = vpop.trf.xlu0
    %v686 = vpop.trf.xlu0
    %v687 = vpop.trf.xlu0
    %v688 = vpop.trf.xlu0
    %v689 = vpop.trf.xlu0
    %v690 = vpop.trf.xlu0
    %v691 = vpop.trf.xlu0
    %v692 = vpop.trf.xlu0
    %v693 = vpop.trf.xlu0
    %v694 = vpop.trf.xlu0
    %v695 = vpop.trf.xlu0
    %v696 = vpop.trf.xlu0
    %v697 = vpop.trf.xlu0
    %v698 = vpop.trf.xlu0
    %699 = vxpose.xlu0.b32.start [1/16] %v503, 128
    %700 = vxpose.xlu0.b32.cont [2/16] 0.0, 128
    %701 = vxpose.xlu0.b32.cont [3/16] 0.0, 128
    %702 = vxpose.xlu0.b32.cont [4/16] 0.0, 128
    %703 = vxpose.xlu0.b32.cont [5/16] 0.0, 128
    %704 = vxpose.xlu0.b32.cont [6/16] 0.0, 128
    %705 = vxpose.xlu0.b32.cont [7/16] 0.0, 128
    %706 = vxpose.xlu0.b32.cont [8/16] 0.0, 128
    %707 = vxpose.xlu0.b32.cont [9/16] 0.0, 128
    %708 = vxpose.xlu0.b32.cont [10/16] 0.0, 128
    %709 = vxpose.xlu0.b32.cont [11/16] 0.0, 128
    %710 = vxpose.xlu0.b32.cont [12/16] 0.0, 128
    %711 = vxpose.xlu0.b32.cont [13/16] 0.0, 128
    %712 = vxpose.xlu0.b32.cont [14/16] 0.0, 128
    %713 = vxpose.xlu0.b32.cont [15/16] 0.0, 128
    %714 = vxpose.xlu0.b32.end [16/16] 0.0, 128
    %v715 = vpop.trf.xlu0
    %v716 = vpop.trf.xlu0
    %v717 = vpop.trf.xlu0
    %v718 = vpop.trf.xlu0
    %v719 = vpop.trf.xlu0
    %v720 = vpop.trf.xlu0
    %v721 = vpop.trf.xlu0
    %v722 = vpop.trf.xlu0
    %v723 = vpop.trf.xlu0
    %v724 = vpop.trf.xlu0
    %v725 = vpop.trf.xlu0
    %v726 = vpop.trf.xlu0
    %v727 = vpop.trf.xlu0
    %v728 = vpop.trf.xlu0
    %v729 = vpop.trf.xlu0
    %v730 = vpop.trf.xlu0
    %731 = vxpose.xlu0.b32.start [1/16] %v655, 128
    %732 = vxpose.xlu0.b32.cont [2/16] 0.0, 128
    %733 = vxpose.xlu0.b32.cont [3/16] 0.0, 128
    %734 = vxpose.xlu0.b32.cont [4/16] 0.0, 128
    %735 = vxpose.xlu0.b32.cont [5/16] 0.0, 128
    %736 = vxpose.xlu0.b32.cont [6/16] 0.0, 128
    %737 = vxpose.xlu0.b32.cont [7/16] 0.0, 128
    %738 = vxpose.xlu0.b32.cont [8/16] 0.0, 128
    %739 = vxpose.xlu0.b32.cont [9/16] 0.0, 128
    %740 = vxpose.xlu0.b32.cont [10/16] 0.0, 128
    %741 = vxpose.xlu0.b32.cont [11/16] 0.0, 128
    %742 = vxpose.xlu0.b32.cont [12/16] 0.0, 128
    %743 = vxpose.xlu0.b32.cont [13/16] 0.0, 128
    %744 = vxpose.xlu0.b32.cont [14/16] 0.0, 128
    %745 = vxpose.xlu0.b32.cont [15/16] 0.0, 128
    %746 = vxpose.xlu0.b32.end [16/16] 0.0, 128
    %v747 = vpop.trf.xlu0
    %v748 = vpop.trf.xlu0
    %v749 = vpop.trf.xlu0
    %v750 = vpop.trf.xlu0
    %v751 = vpop.trf.xlu0
    %v752 = vpop.trf.xlu0
    %v753 = vpop.trf.xlu0
    %v754 = vpop.trf.xlu0
    %v755 = vpop.trf.xlu0
    %v756 = vpop.trf.xlu0
    %v757 = vpop.trf.xlu0
    %v758 = vpop.trf.xlu0
    %v759 = vpop.trf.xlu0
    %v760 = vpop.trf.xlu0
    %v761 = vpop.trf.xlu0
    %v762 = vpop.trf.xlu0
    %763 = vxpose.xlu0.b32.start [1/16] %v657, 128
    %764 = vxpose.xlu0.b32.cont [2/16] 0.0, 128
    %765 = vxpose.xlu0.b32.cont [3/16] 0.0, 128
    %766 = vxpose.xlu0.b32.cont [4/16] 0.0, 128
    %767 = vxpose.xlu0.b32.cont [5/16] 0.0, 128
    %768 = vxpose.xlu0.b32.cont [6/16] 0.0, 128
    %769 = vxpose.xlu0.b32.cont [7/16] 0.0, 128
    %770 = vxpose.xlu0.b32.cont [8/16] 0.0, 128
    %771 = vxpose.xlu0.b32.cont [9/16] 0.0, 128
    %772 = vxpose.xlu0.b32.cont [10/16] 0.0, 128
    %773 = vxpose.xlu0.b32.cont [11/16] 0.0, 128
    %774 = vxpose.xlu0.b32.cont [12/16] 0.0, 128
    %775 = vxpose.xlu0.b32.cont [13/16] 0.0, 128
    %776 = vxpose.xlu0.b32.cont [14/16] 0.0, 128
    %777 = vxpose.xlu0.b32.cont [15/16] 0.0, 128
    %778 = vxpose.xlu0.b32.end [16/16] 0.0, 128
    %v779 = vpop.trf.xlu0
    %v780 = vpop.trf.xlu0
    %v781 = vpop.trf.xlu0
    %v782 = vpop.trf.xlu0
    %v783 = vpop.trf.xlu0
    %v784 = vpop.trf.xlu0
    %v785 = vpop.trf.xlu0
    %v786 = vpop.trf.xlu0
    %v787 = vpop.trf.xlu0
    %v788 = vpop.trf.xlu0
    %v789 = vpop.trf.xlu0
    %v790 = vpop.trf.xlu0
    %v791 = vpop.trf.xlu0
    %v792 = vpop.trf.xlu0
    %v793 = vpop.trf.xlu0
    %v794 = vpop.trf.xlu0
    %vm795 = vcmask 64512
    %v797 = vsel %vm795, %v683, 0
    %v800 = vsel %vm795, %v684, 0
    %v803 = vsel %vm795, %v685, 0
    %v806 = vsel %vm795, %v686, 0
    %v809 = vsel %vm795, %v687, 0
    %v812 = vsel %vm795, %v688, 0
    %v815 = vsel %vm795, %v689, 0
    %v818 = vsel %vm795, %v690, 0
    %v821 = vsel %vm795, %v691, 0
    %v824 = vsel %vm795, %v692, 0
    %v827 = vsel %vm795, %v693, 0
    %v830 = vsel %vm795, %v694, 0
    %v833 = vsel %vm795, %v695, 0
    %v836 = vsel %vm795, %v696, 0
    %v839 = vsel %vm795, %v697, 0
    %v842 = vsel %vm795, %v698, 0
    %v845 = vsel %vm795, %v715, 0
    %v848 = vsel %vm795, %v716, 0
    %v851 = vsel %vm795, %v717, 0
    %v854 = vsel %vm795, %v718, 0
    %v857 = vsel %vm795, %v719, 0
    %v860 = vsel %vm795, %v720, 0
    %v863 = vsel %vm795, %v721, 0
    %v866 = vsel %vm795, %v722, 0
    %v869 = vsel %vm795, %v723, 0
    %v872 = vsel %vm795, %v724, 0
    %v875 = vsel %vm795, %v725, 0
    %v878 = vsel %vm795, %v726, 0
    %v881 = vsel %vm795, %v727, 0
    %v884 = vsel %vm795, %v728, 0
    %v887 = vsel %vm795, %v729, 0
    %v890 = vsel %vm795, %v730, 0
    %v893 = vsel %vm795, %v747, 0
    %v896 = vsel %vm795, %v748, 0
    %v899 = vsel %vm795, %v749, 0
    %v902 = vsel %vm795, %v750, 0
    %v905 = vsel %vm795, %v751, 0
    %v908 = vsel %vm795, %v752, 0
    %v911 = vsel %vm795, %v753, 0
    %v914 = vsel %vm795, %v754, 0
    %v917 = vsel %vm795, %v755, 0
    %v920 = vsel %vm795, %v756, 0
    %v923 = vsel %vm795, %v757, 0
    %v926 = vsel %vm795, %v758, 0
    %v929 = vsel %vm795, %v759, 0
    %v932 = vsel %vm795, %v760, 0
    %v935 = vsel %vm795, %v761, 0
    %v938 = vsel %vm795, %v762, 0
    %v941 = vsel %vm795, %v779, 0
    %v944 = vsel %vm795, %v780, 0
    %v947 = vsel %vm795, %v781, 0
    %v950 = vsel %vm795, %v782, 0
    %v953 = vsel %vm795, %v783, 0
    %v956 = vsel %vm795, %v784, 0
    %v959 = vsel %vm795, %v785, 0
    %v962 = vsel %vm795, %v786, 0
    %v965 = vsel %vm795, %v787, 0
    %v968 = vsel %vm795, %v788, 0
    %v971 = vsel %vm795, %v789, 0
    %v974 = vsel %vm795, %v790, 0
    %v977 = vsel %vm795, %v791, 0
    %v980 = vsel %vm795, %v792, 0
    %v983 = vsel %vm795, %v793, 0
    %v986 = vsel %vm795, %v794, 0
    %988 = vmatprep.subr.mxu0 0.0
    %989 = vmatpush1.msra.mxu0 0.0
    %990 = vmatprep.subr.mxu0 0.0
    %991 = vmatpush1.msra.mxu0 0.0
    %992 = vmatprep.subr.mxu0 0.0
    %993 = vmatpush1.msra.mxu0 0.0
    %994 = vmatprep.subr.mxu0 0.0
    %995 = vmatpush1.msra.mxu0 0.0
    %996 = vmatprep.subr.mxu0 0.0
    %997 = vmatpush1.msra.mxu0 0.0
    %998 = vmatprep.subr.mxu0 0.0
    %999 = vmatpush1.msra.mxu0 0.0
    %1000 = vmatprep.subr.mxu0 0.0
    %1001 = vmatpush1.msra.mxu0 0.0
    %1002 = vmatprep.subr.mxu0 0.0
    %1003 = vmatpush1.msra.mxu0 0.0
    %1004 = vmatprep.subr.mxu0 0.0
    %1005 = vmatpush1.msra.mxu0 0.0
    %1006 = vmatprep.subr.mxu0 0.0
    %1007 = vmatpush1.msra.mxu0 0.0
    %1008 = vmatprep.subr.mxu0 0.0
    %1009 = vmatpush1.msra.mxu0 0.0
    %1010 = vmatprep.subr.mxu0 0.0
    %1011 = vmatpush1.msra.mxu0 0.0
    %1012 = vmatprep.subr.mxu0 0.0
    %1013 = vmatpush1.msra.mxu0 0.0
    %1014 = vmatprep.subr.mxu0 0.0
    %1015 = vmatpush1.msra.mxu0 0.0
    %1016 = vmatprep.subr.mxu0 0.0
    %1017 = vmatpush1.msra.mxu0 0.0
    %1018 = vmatprep.subr.mxu0 %v666
    %1019 = vmatpush1.msra.mxu0 %v665
    %1020 = vmatprep.subr.mxu0 0.0
    %1021 = vmatpush2.msra.mxu0 0.0
    %1022 = vmatprep.subr.mxu0 0.0
    %1023 = vmatpush2.msra.mxu0 0.0
    %1024 = vmatprep.subr.mxu0 0.0
    %1025 = vmatpush2.msra.mxu0 0.0
    %1026 = vmatprep.subr.mxu0 0.0
    %1027 = vmatpush2.msra.mxu0 0.0
    %1028 = vmatprep.subr.mxu0 0.0
    %1029 = vmatpush2.msra.mxu0 0.0
    %1030 = vmatprep.subr.mxu0 0.0
    %1031 = vmatpush2.msra.mxu0 0.0
    %1032 = vmatprep.subr.mxu0 0.0
    %1033 = vmatpush2.msra.mxu0 0.0
    %1034 = vmatprep.subr.mxu0 0.0
    %1035 = vmatpush2.msra.mxu0 0.0
    %1036 = vmatprep.subr.mxu0 0.0
    %1037 = vmatpush2.msra.mxu0 0.0
    %1038 = vmatprep.subr.mxu0 0.0
    %1039 = vmatpush2.msra.mxu0 0.0
    %1040 = vmatprep.subr.mxu0 0.0
    %1041 = vmatpush2.msra.mxu0 0.0
    %1042 = vmatprep.subr.mxu0 0.0
    %1043 = vmatpush2.msra.mxu0 0.0
    %1044 = vmatprep.subr.mxu0 0.0
    %1045 = vmatpush2.msra.mxu0 0.0
    %1046 = vmatprep.subr.mxu0 0.0
    %1047 = vmatpush2.msra.mxu0 0.0
    %1048 = vmatprep.subr.mxu0 0.0
    %1049 = vmatpush2.msra.mxu0 0.0
    %1050 = vmatprep.subr.mxu0 0.0
    %1051 = vmatpush2.msra.mxu0 0.0
    %1052 = vmatprep.mubr.f32.mxu0 0.0
    %1053 = vmatmul.mubr.f32.gmra.mxu0 %v797
    %v1054 = vpop.f32.mrf.mxu0
    %v1055 = vadd.f32 0.0, %v1054
    %v1056 = vpop.f32.mrf.mxu0
    %v1057 = vadd.f32 0.0, %v1056
    %1058 = vmatprep.mubr.f32.mxu0 0.0
    %1059 = vmatmul.mubr.f32.gmra.mxu0 %v800
    %v1060 = vpop.f32.mrf.mxu0
    %v1061 = vadd.f32 0.0, %v1060
    %v1062 = vpop.f32.mrf.mxu0
    %v1063 = vadd.f32 0.0, %v1062
    %1064 = vmatprep.mubr.f32.mxu0 0.0
    %1065 = vmatmul.mubr.f32.gmra.mxu0 %v803
    %v1066 = vpop.f32.mrf.mxu0
    %v1067 = vadd.f32 0.0, %v1066
    %v1068 = vpop.f32.mrf.mxu0
    %v1069 = vadd.f32 0.0, %v1068
    %1070 = vmatprep.mubr.f32.mxu0 0.0
    %1071 = vmatmul.mubr.f32.gmra.mxu0 %v806
    %v1072 = vpop.f32.mrf.mxu0
    %v1073 = vadd.f32 0.0, %v1072
    %v1074 = vpop.f32.mrf.mxu0
    %v1075 = vadd.f32 0.0, %v1074
    %1076 = vmatprep.mubr.f32.mxu0 0.0
    %1077 = vmatmul.mubr.f32.gmra.mxu0 %v809
    %v1078 = vpop.f32.mrf.mxu0
    %v1079 = vadd.f32 0.0, %v1078
    %v1080 = vpop.f32.mrf.mxu0
    %v1081 = vadd.f32 0.0, %v1080
    %1082 = vmatprep.mubr.f32.mxu0 0.0
    %1083 = vmatmul.mubr.f32.gmra.mxu0 %v812
    %v1084 = vpop.f32.mrf.mxu0
    %v1085 = vadd.f32 0.0, %v1084
    %v1086 = vpop.f32.mrf.mxu0
    %v1087 = vadd.f32 0.0, %v1086
    %1088 = vmatprep.mubr.f32.mxu0 0.0
    %1089 = vmatmul.mubr.f32.gmra.mxu0 %v815
    %v1090 = vpop.f32.mrf.mxu0
    %v1091 = vadd.f32 0.0, %v1090
    %v1092 = vpop.f32.mrf.mxu0
    %v1093 = vadd.f32 0.0, %v1092
    %1094 = vmatprep.mubr.f32.mxu0 0.0
    %1095 = vmatmul.mubr.f32.gmra.mxu0 %v818
    %v1096 = vpop.f32.mrf.mxu0
    %v1097 = vadd.f32 0.0, %v1096
    %v1098 = vpop.f32.mrf.mxu0
    %v1099 = vadd.f32 0.0, %v1098
    %1100 = vmatprep.mubr.f32.mxu0 0.0
    %1101 = vmatmul.mubr.f32.gmra.mxu0 %v821
    %v1102 = vpop.f32.mrf.mxu0
    %v1103 = vadd.f32 0.0, %v1102
    %v1104 = vpop.f32.mrf.mxu0
    %v1105 = vadd.f32 0.0, %v1104
    %1106 = vmatprep.mubr.f32.mxu0 0.0
    %1107 = vmatmul.mubr.f32.gmra.mxu0 %v824
    %v1108 = vpop.f32.mrf.mxu0
    %v1109 = vadd.f32 0.0, %v1108
    %v1110 = vpop.f32.mrf.mxu0
    %v1111 = vadd.f32 0.0, %v1110
    %1112 = vmatprep.mubr.f32.mxu0 0.0
    %1113 = vmatmul.mubr.f32.gmra.mxu0 %v827
    %v1114 = vpop.f32.mrf.mxu0
    %v1115 = vadd.f32 0.0, %v1114
    %v1116 = vpop.f32.mrf.mxu0
    %v1117 = vadd.f32 0.0, %v1116
    %1118 = vmatprep.mubr.f32.mxu0 0.0
    %1119 = vmatmul.mubr.f32.gmra.mxu0 %v830
    %v1120 = vpop.f32.mrf.mxu0
    %v1121 = vadd.f32 0.0, %v1120
    %v1122 = vpop.f32.mrf.mxu0
    %v1123 = vadd.f32 0.0, %v1122
    %1124 = vmatprep.mubr.f32.mxu0 0.0
    %1125 = vmatmul.mubr.f32.gmra.mxu0 %v833
    %v1126 = vpop.f32.mrf.mxu0
    %v1127 = vadd.f32 0.0, %v1126
    %v1128 = vpop.f32.mrf.mxu0
    %v1129 = vadd.f32 0.0, %v1128
    %1130 = vmatprep.mubr.f32.mxu0 0.0
    %1131 = vmatmul.mubr.f32.gmra.mxu0 %v836
    %v1132 = vpop.f32.mrf.mxu0
    %v1133 = vadd.f32 0.0, %v1132
    %v1134 = vpop.f32.mrf.mxu0
    %v1135 = vadd.f32 0.0, %v1134
    %1136 = vmatprep.mubr.f32.mxu0 0.0
    %1137 = vmatmul.mubr.f32.gmra.mxu0 %v839
    %v1138 = vpop.f32.mrf.mxu0
    %v1139 = vadd.f32 0.0, %v1138
    %v1140 = vpop.f32.mrf.mxu0
    %v1141 = vadd.f32 0.0, %v1140
    %1142 = vmatprep.mubr.f32.mxu0 0.0
    %1143 = vmatmul.mubr.f32.gmra.mxu0 %v842
    %v1144 = vpop.f32.mrf.mxu0
    %v1145 = vadd.f32 0.0, %v1144
    %v1146 = vpop.f32.mrf.mxu0
    %v1147 = vadd.f32 0.0, %v1146
    %1148 = vmatprep.mubr.f32.mxu0 0.0
    %1149 = vmatmul.mubr.f32.gmra.mxu0 %v845
    %v1150 = vpop.f32.mrf.mxu0
    %v1151 = vadd.f32 0.0, %v1150
    %v1152 = vpop.f32.mrf.mxu0
    %v1153 = vadd.f32 0.0, %v1152
    %1154 = vmatprep.mubr.f32.mxu0 0.0
    %1155 = vmatmul.mubr.f32.gmra.mxu0 %v848
    %v1156 = vpop.f32.mrf.mxu0
    %v1157 = vadd.f32 0.0, %v1156
    %v1158 = vpop.f32.mrf.mxu0
    %v1159 = vadd.f32 0.0, %v1158
    %1160 = vmatprep.mubr.f32.mxu0 0.0
    %1161 = vmatmul.mubr.f32.gmra.mxu0 %v851
    %v1162 = vpop.f32.mrf.mxu0
    %v1163 = vadd.f32 0.0, %v1162
    %v1164 = vpop.f32.mrf.mxu0
    %v1165 = vadd.f32 0.0, %v1164
    %1166 = vmatprep.mubr.f32.mxu0 0.0
    %1167 = vmatmul.mubr.f32.gmra.mxu0 %v854
    %v1168 = vpop.f32.mrf.mxu0
    %v1169 = vadd.f32 0.0, %v1168
    %v1170 = vpop.f32.mrf.mxu0
    %v1171 = vadd.f32 0.0, %v1170
    %1172 = vmatprep.mubr.f32.mxu0 0.0
    %1173 = vmatmul.mubr.f32.gmra.mxu0 %v857
    %v1174 = vpop.f32.mrf.mxu0
    %v1175 = vadd.f32 0.0, %v1174
    %v1176 = vpop.f32.mrf.mxu0
    %v1177 = vadd.f32 0.0, %v1176
    %1178 = vmatprep.mubr.f32.mxu0 0.0
    %1179 = vmatmul.mubr.f32.gmra.mxu0 %v860
    %v1180 = vpop.f32.mrf.mxu0
    %v1181 = vadd.f32 0.0, %v1180
    %v1182 = vpop.f32.mrf.mxu0
    %v1183 = vadd.f32 0.0, %v1182
    %1184 = vmatprep.mubr.f32.mxu0 0.0
    %1185 = vmatmul.mubr.f32.gmra.mxu0 %v863
    %v1186 = vpop.f32.mrf.mxu0
    %v1187 = vadd.f32 0.0, %v1186
    %v1188 = vpop.f32.mrf.mxu0
    %v1189 = vadd.f32 0.0, %v1188
    %1190 = vmatprep.mubr.f32.mxu0 0.0
    %1191 = vmatmul.mubr.f32.gmra.mxu0 %v866
    %v1192 = vpop.f32.mrf.mxu0
    %v1193 = vadd.f32 0.0, %v1192
    %v1194 = vpop.f32.mrf.mxu0
    %v1195 = vadd.f32 0.0, %v1194
    %1196 = vmatprep.mubr.f32.mxu0 0.0
    %1197 = vmatmul.mubr.f32.gmra.mxu0 %v869
    %v1198 = vpop.f32.mrf.mxu0
    %v1199 = vadd.f32 0.0, %v1198
    %v1200 = vpop.f32.mrf.mxu0
    %v1201 = vadd.f32 0.0, %v1200
    %1202 = vmatprep.mubr.f32.mxu0 0.0
    %1203 = vmatmul.mubr.f32.gmra.mxu0 %v872
    %v1204 = vpop.f32.mrf.mxu0
    %v1205 = vadd.f32 0.0, %v1204
    %v1206 = vpop.f32.mrf.mxu0
    %v1207 = vadd.f32 0.0, %v1206
    %1208 = vmatprep.mubr.f32.mxu0 0.0
    %1209 = vmatmul.mubr.f32.gmra.mxu0 %v875
    %v1210 = vpop.f32.mrf.mxu0
    %v1211 = vadd.f32 0.0, %v1210
    %v1212 = vpop.f32.mrf.mxu0
    %v1213 = vadd.f32 0.0, %v1212
    %1214 = vmatprep.mubr.f32.mxu0 0.0
    %1215 = vmatmul.mubr.f32.gmra.mxu0 %v878
    %v1216 = vpop.f32.mrf.mxu0
    %v1217 = vadd.f32 0.0, %v1216
    %v1218 = vpop.f32.mrf.mxu0
    %v1219 = vadd.f32 0.0, %v1218
    %1220 = vmatprep.mubr.f32.mxu0 0.0
    %1221 = vmatmul.mubr.f32.gmra.mxu0 %v881
    %v1222 = vpop.f32.mrf.mxu0
    %v1223 = vadd.f32 0.0, %v1222
    %v1224 = vpop.f32.mrf.mxu0
    %v1225 = vadd.f32 0.0, %v1224
    %1226 = vmatprep.mubr.f32.mxu0 0.0
    %1227 = vmatmul.mubr.f32.gmra.mxu0 %v884
    %v1228 = vpop.f32.mrf.mxu0
    %v1229 = vadd.f32 0.0, %v1228
    %v1230 = vpop.f32.mrf.mxu0
    %v1231 = vadd.f32 0.0, %v1230
    %1232 = vmatprep.mubr.f32.mxu0 0.0
    %1233 = vmatmul.mubr.f32.gmra.mxu0 %v887
    %v1234 = vpop.f32.mrf.mxu0
    %v1235 = vadd.f32 0.0, %v1234
    %v1236 = vpop.f32.mrf.mxu0
    %v1237 = vadd.f32 0.0, %v1236
    %1238 = vmatprep.mubr.f32.mxu0 0.0
    %1239 = vmatmul.mubr.f32.gmra.mxu0 %v890
    %v1240 = vpop.f32.mrf.mxu0
    %v1241 = vadd.f32 0.0, %v1240
    %v1242 = vpop.f32.mrf.mxu0
    %v1243 = vadd.f32 0.0, %v1242
    %1244 = vmatprep.mubr.f32.mxu0 0.0
    %1245 = vmatmul.mubr.f32.gmra.mxu0 %v893
    %v1246 = vpop.f32.mrf.mxu0
    %v1247 = vadd.f32 0.0, %v1246
    %v1248 = vpop.f32.mrf.mxu0
    %v1249 = vadd.f32 0.0, %v1248
    %1250 = vmatprep.mubr.f32.mxu0 0.0
    %1251 = vmatmul.mubr.f32.gmra.mxu0 %v896
    %v1252 = vpop.f32.mrf.mxu0
    %v1253 = vadd.f32 0.0, %v1252
    %v1254 = vpop.f32.mrf.mxu0
    %v1255 = vadd.f32 0.0, %v1254
    %1256 = vmatprep.mubr.f32.mxu0 0.0
    %1257 = vmatmul.mubr.f32.gmra.mxu0 %v899
    %v1258 = vpop.f32.mrf.mxu0
    %v1259 = vadd.f32 0.0, %v1258
    %v1260 = vpop.f32.mrf.mxu0
    %v1261 = vadd.f32 0.0, %v1260
    %1262 = vmatprep.mubr.f32.mxu0 0.0
    %1263 = vmatmul.mubr.f32.gmra.mxu0 %v902
    %v1264 = vpop.f32.mrf.mxu0
    %v1265 = vadd.f32 0.0, %v1264
    %v1266 = vpop.f32.mrf.mxu0
    %v1267 = vadd.f32 0.0, %v1266
    %1268 = vmatprep.mubr.f32.mxu0 0.0
    %1269 = vmatmul.mubr.f32.gmra.mxu0 %v905
    %v1270 = vpop.f32.mrf.mxu0
    %v1271 = vadd.f32 0.0, %v1270
    %v1272 = vpop.f32.mrf.mxu0
    %v1273 = vadd.f32 0.0, %v1272
    %1274 = vmatprep.mubr.f32.mxu0 0.0
    %1275 = vmatmul.mubr.f32.gmra.mxu0 %v908
    %v1276 = vpop.f32.mrf.mxu0
    %v1277 = vadd.f32 0.0, %v1276
    %v1278 = vpop.f32.mrf.mxu0
    %v1279 = vadd.f32 0.0, %v1278
    %1280 = vmatprep.mubr.f32.mxu0 0.0
    %1281 = vmatmul.mubr.f32.gmra.mxu0 %v911
    %v1282 = vpop.f32.mrf.mxu0
    %v1283 = vadd.f32 0.0, %v1282
    %v1284 = vpop.f32.mrf.mxu0
    %v1285 = vadd.f32 0.0, %v1284
    %1286 = vmatprep.mubr.f32.mxu0 0.0
    %1287 = vmatmul.mubr.f32.gmra.mxu0 %v914
    %v1288 = vpop.f32.mrf.mxu0
    %v1289 = vadd.f32 0.0, %v1288
    %v1290 = vpop.f32.mrf.mxu0
    %v1291 = vadd.f32 0.0, %v1290
    %1292 = vmatprep.mubr.f32.mxu0 0.0
    %1293 = vmatmul.mubr.f32.gmra.mxu0 %v917
    %v1294 = vpop.f32.mrf.mxu0
    %v1295 = vadd.f32 0.0, %v1294
    %v1296 = vpop.f32.mrf.mxu0
    %v1297 = vadd.f32 0.0, %v1296
    %1298 = vmatprep.mubr.f32.mxu0 0.0
    %1299 = vmatmul.mubr.f32.gmra.mxu0 %v920
    %v1300 = vpop.f32.mrf.mxu0
    %v1301 = vadd.f32 0.0, %v1300
    %v1302 = vpop.f32.mrf.mxu0
    %v1303 = vadd.f32 0.0, %v1302
    %1304 = vmatprep.mubr.f32.mxu0 0.0
    %1305 = vmatmul.mubr.f32.gmra.mxu0 %v923
    %v1306 = vpop.f32.mrf.mxu0
    %v1307 = vadd.f32 0.0, %v1306
    %v1308 = vpop.f32.mrf.mxu0
    %v1309 = vadd.f32 0.0, %v1308
    %1310 = vmatprep.mubr.f32.mxu0 0.0
    %1311 = vmatmul.mubr.f32.gmra.mxu0 %v926
    %v1312 = vpop.f32.mrf.mxu0
    %v1313 = vadd.f32 0.0, %v1312
    %v1314 = vpop.f32.mrf.mxu0
    %v1315 = vadd.f32 0.0, %v1314
    %1316 = vmatprep.mubr.f32.mxu0 0.0
    %1317 = vmatmul.mubr.f32.gmra.mxu0 %v929
    %v1318 = vpop.f32.mrf.mxu0
    %v1319 = vadd.f32 0.0, %v1318
    %v1320 = vpop.f32.mrf.mxu0
    %v1321 = vadd.f32 0.0, %v1320
    %1322 = vmatprep.mubr.f32.mxu0 0.0
    %1323 = vmatmul.mubr.f32.gmra.mxu0 %v932
    %v1324 = vpop.f32.mrf.mxu0
    %v1325 = vadd.f32 0.0, %v1324
    %v1326 = vpop.f32.mrf.mxu0
    %v1327 = vadd.f32 0.0, %v1326
    %1328 = vmatprep.mubr.f32.mxu0 0.0
    %1329 = vmatmul.mubr.f32.gmra.mxu0 %v935
    %v1330 = vpop.f32.mrf.mxu0
    %v1331 = vadd.f32 0.0, %v1330
    %v1332 = vpop.f32.mrf.mxu0
    %v1333 = vadd.f32 0.0, %v1332
    %1334 = vmatprep.mubr.f32.mxu0 0.0
    %1335 = vmatmul.mubr.f32.gmra.mxu0 %v938
    %v1336 = vpop.f32.mrf.mxu0
    %v1337 = vadd.f32 0.0, %v1336
    %v1338 = vpop.f32.mrf.mxu0
    %v1339 = vadd.f32 0.0, %v1338
    %1340 = vmatprep.mubr.f32.mxu0 0.0
    %1341 = vmatmul.mubr.f32.gmra.mxu0 %v941
    %v1342 = vpop.f32.mrf.mxu0
    %v1343 = vadd.f32 0.0, %v1342
    %v1344 = vpop.f32.mrf.mxu0
    %v1345 = vadd.f32 0.0, %v1344
    %1346 = vmatprep.mubr.f32.mxu0 0.0
    %1347 = vmatmul.mubr.f32.gmra.mxu0 %v944
    %v1348 = vpop.f32.mrf.mxu0
    %v1349 = vadd.f32 0.0, %v1348
    %v1350 = vpop.f32.mrf.mxu0
    %v1351 = vadd.f32 0.0, %v1350
    %1352 = vmatprep.mubr.f32.mxu0 0.0
    %1353 = vmatmul.mubr.f32.gmra.mxu0 %v947
    %v1354 = vpop.f32.mrf.mxu0
    %v1355 = vadd.f32 0.0, %v1354
    %v1356 = vpop.f32.mrf.mxu0
    %v1357 = vadd.f32 0.0, %v1356
    %1358 = vmatprep.mubr.f32.mxu0 0.0
    %1359 = vmatmul.mubr.f32.gmra.mxu0 %v950
    %v1360 = vpop.f32.mrf.mxu0
    %v1361 = vadd.f32 0.0, %v1360
    %v1362 = vpop.f32.mrf.mxu0
    %v1363 = vadd.f32 0.0, %v1362
    %1364 = vmatprep.mubr.f32.mxu0 0.0
    %1365 = vmatmul.mubr.f32.gmra.mxu0 %v953
    %v1366 = vpop.f32.mrf.mxu0
    %v1367 = vadd.f32 0.0, %v1366
    %v1368 = vpop.f32.mrf.mxu0
    %v1369 = vadd.f32 0.0, %v1368
    %1370 = vmatprep.mubr.f32.mxu0 0.0
    %1371 = vmatmul.mubr.f32.gmra.mxu0 %v956
    %v1372 = vpop.f32.mrf.mxu0
    %v1373 = vadd.f32 0.0, %v1372
    %v1374 = vpop.f32.mrf.mxu0
    %v1375 = vadd.f32 0.0, %v1374
    %1376 = vmatprep.mubr.f32.mxu0 0.0
    %1377 = vmatmul.mubr.f32.gmra.mxu0 %v959
    %v1378 = vpop.f32.mrf.mxu0
    %v1379 = vadd.f32 0.0, %v1378
    %v1380 = vpop.f32.mrf.mxu0
    %v1381 = vadd.f32 0.0, %v1380
    %1382 = vmatprep.mubr.f32.mxu0 0.0
    %1383 = vmatmul.mubr.f32.gmra.mxu0 %v962
    %v1384 = vpop.f32.mrf.mxu0
    %v1385 = vadd.f32 0.0, %v1384
    %v1386 = vpop.f32.mrf.mxu0
    %v1387 = vadd.f32 0.0, %v1386
    %1388 = vmatprep.mubr.f32.mxu0 0.0
    %1389 = vmatmul.mubr.f32.gmra.mxu0 %v965
    %v1390 = vpop.f32.mrf.mxu0
    %v1391 = vadd.f32 0.0, %v1390
    %v1392 = vpop.f32.mrf.mxu0
    %v1393 = vadd.f32 0.0, %v1392
    %1394 = vmatprep.mubr.f32.mxu0 0.0
    %1395 = vmatmul.mubr.f32.gmra.mxu0 %v968
    %v1396 = vpop.f32.mrf.mxu0
    %v1397 = vadd.f32 0.0, %v1396
    %v1398 = vpop.f32.mrf.mxu0
    %v1399 = vadd.f32 0.0, %v1398
    %1400 = vmatprep.mubr.f32.mxu0 0.0
    %1401 = vmatmul.mubr.f32.gmra.mxu0 %v971
    %v1402 = vpop.f32.mrf.mxu0
    %v1403 = vadd.f32 0.0, %v1402
    %v1404 = vpop.f32.mrf.mxu0
    %v1405 = vadd.f32 0.0, %v1404
    %1406 = vmatprep.mubr.f32.mxu0 0.0
    %1407 = vmatmul.mubr.f32.gmra.mxu0 %v974
    %v1408 = vpop.f32.mrf.mxu0
    %v1409 = vadd.f32 0.0, %v1408
    %v1410 = vpop.f32.mrf.mxu0
    %v1411 = vadd.f32 0.0, %v1410
    %1412 = vmatprep.mubr.f32.mxu0 0.0
    %1413 = vmatmul.mubr.f32.gmra.mxu0 %v977
    %v1414 = vpop.f32.mrf.mxu0
    %v1415 = vadd.f32 0.0, %v1414
    %v1416 = vpop.f32.mrf.mxu0
    %v1417 = vadd.f32 0.0, %v1416
    %1418 = vmatprep.mubr.f32.mxu0 0.0
    %1419 = vmatmul.mubr.f32.gmra.mxu0 %v980
    %v1420 = vpop.f32.mrf.mxu0
    %v1421 = vadd.f32 0.0, %v1420
    %v1422 = vpop.f32.mrf.mxu0
    %v1423 = vadd.f32 0.0, %v1422
    %1424 = vmatprep.mubr.f32.mxu0 0.0
    %1425 = vmatmul.mubr.f32.gmra.mxu0 %v983
    %v1426 = vpop.f32.mrf.mxu0
    %v1427 = vadd.f32 0.0, %v1426
    %v1428 = vpop.f32.mrf.mxu0
    %v1429 = vadd.f32 0.0, %v1428
    %1430 = vmatprep.mubr.f32.mxu0 0.0
    %1431 = vmatmul.mubr.f32.gmra.mxu0 %v986
    %v1432 = vpop.f32.mrf.mxu0
    %v1433 = vadd.f32 0.0, %v1432
    %v1434 = vpop.f32.mrf.mxu0
    %v1435 = vadd.f32 0.0, %v1434
    %1436 = vdwg.mxu0
    %1437 = vst [vmem:[#allocation10] sm:$0xff] %v1055
    %1438 = vst [vmem:[#allocation10 + $0x8] sm:$0xff] %v1057
    %1439 = vst [vmem:[#allocation10 + $0x10] sm:$0xff] %v1061
    %1440 = vst [vmem:[#allocation10 + $0x18] sm:$0xff] %v1063
    %1441 = vst [vmem:[#allocation10 + $0x20] sm:$0xff] %v1067
    %1442 = vst [vmem:[#allocation10 + $0x28] sm:$0xff] %v1069
    %1443 = vst [vmem:[#allocation10 + $0x30] sm:$0xff] %v1073
    %1444 = vst [vmem:[#allocation10 + $0x38] sm:$0xff] %v1075
    %1445 = vst [vmem:[#allocation10 + $0x40] sm:$0xff] %v1079
    %1446 = vst [vmem:[#allocation10 + $0x48] sm:$0xff] %v1081
    %1447 = vst [vmem:[#allocation10 + $0x50] sm:$0xff] %v1085
    %1448 = vst [vmem:[#allocation10 + $0x58] sm:$0xff] %v1087
    %1449 = vst [vmem:[#allocation10 + $0x60] sm:$0xff] %v1091
    %1450 = vst [vmem:[#allocation10 + $0x68] sm:$0xff] %v1093
    %1451 = vst [vmem:[#allocation10 + $0x70] sm:$0xff] %v1097
    %1452 = vst [vmem:[#allocation10 + $0x78] sm:$0xff] %v1099
    %1453 = vst [vmem:[#allocation10 + $0x80] sm:$0xff] %v1103
    %1454 = vst [vmem:[#allocation10 + $0x88] sm:$0xff] %v1105
    %1455 = vst [vmem:[#allocation10 + $0x90] sm:$0xff] %v1109
    %1456 = vst [vmem:[#allocation10 + $0x98] sm:$0xff] %v1111
    %1457 = vst [vmem:[#allocation10 + $0xa0] sm:$0xff] %v1115
    %1458 = vst [vmem:[#allocation10 + $0xa8] sm:$0xff] %v1117
    %1459 = vst [vmem:[#allocation10 + $0xb0] sm:$0xff] %v1121
    %1460 = vst [vmem:[#allocation10 + $0xb8] sm:$0xff] %v1123
    %1461 = vst [vmem:[#allocation10 + $0xc0] sm:$0xff] %v1127
    %1462 = vst [vmem:[#allocation10 + $0xc8] sm:$0xff] %v1129
    %1463 = vst [vmem:[#allocation10 + $0xd0] sm:$0xff] %v1133
    %1464 = vst [vmem:[#allocation10 + $0xd8] sm:$0xff] %v1135
    %1465 = vst [vmem:[#allocation10 + $0xe0] sm:$0xff] %v1139
    %1466 = vst [vmem:[#allocation10 + $0xe8] sm:$0xff] %v1141
    %1467 = vst [vmem:[#allocation10 + $0xf0] sm:$0xff] %v1145
    %1468 = vst [vmem:[#allocation10 + $0xf8] sm:$0xff] %v1147
    %1469 = vst [vmem:[#allocation10 + $0x100] sm:$0xff] %v1151
    %1470 = vst [vmem:[#allocation10 + $0x108] sm:$0xff] %v1153
    %1471 = vst [vmem:[#allocation10 + $0x110] sm:$0xff] %v1157
    %1472 = vst [vmem:[#allocation10 + $0x118] sm:$0xff] %v1159
    %1473 = vst [vmem:[#allocation10 + $0x120] sm:$0xff] %v1163
    %1474 = vst [vmem:[#allocation10 + $0x128] sm:$0xff] %v1165
    %1475 = vst [vmem:[#allocation10 + $0x130] sm:$0xff] %v1169
    %1476 = vst [vmem:[#allocation10 + $0x138] sm:$0xff] %v1171
    %1477 = vst [vmem:[#allocation10 + $0x140] sm:$0xff] %v1175
    %1478 = vst [vmem:[#allocation10 + $0x148] sm:$0xff] %v1177
    %1479 = vst [vmem:[#allocation10 + $0x150] sm:$0xff] %v1181
    %1480 = vst [vmem:[#allocation10 + $0x158] sm:$0xff] %v1183
    %1481 = vst [vmem:[#allocation10 + $0x160] sm:$0xff] %v1187
    %1482 = vst [vmem:[#allocation10 + $0x168] sm:$0xff] %v1189
    %1483 = vst [vmem:[#allocation10 + $0x170] sm:$0xff] %v1193
    %1484 = vst [vmem:[#allocation10 + $0x178] sm:$0xff] %v1195
    %1485 = vst [vmem:[#allocation10 + $0x180] sm:$0xff] %v1199
    %1486 = vst [vmem:[#allocation10 + $0x188] sm:$0xff] %v1201
    %1487 = vst [vmem:[#allocation10 + $0x190] sm:$0xff] %v1205
    %1488 = vst [vmem:[#allocation10 + $0x198] sm:$0xff] %v1207
    %1489 = vst [vmem:[#allocation10 + $0x1a0] sm:$0xff] %v1211
    %1490 = vst [vmem:[#allocation10 + $0x1a8] sm:$0xff] %v1213
    %1491 = vst [vmem:[#allocation10 + $0x1b0] sm:$0xff] %v1217
    %1492 = vst [vmem:[#allocation10 + $0x1b8] sm:$0xff] %v1219
    %1493 = vst [vmem:[#allocation10 + $0x1c0] sm:$0xff] %v1223
    %1494 = vst [vmem:[#allocation10 + $0x1c8] sm:$0xff] %v1225
    %1495 = vst [vmem:[#allocation10 + $0x1d0] sm:$0xff] %v1229
    %1496 = vst [vmem:[#allocation10 + $0x1d8] sm:$0xff] %v1231
    %1497 = vst [vmem:[#allocation10 + $0x1e0] sm:$0xff] %v1235
    %1498 = vst [vmem:[#allocation10 + $0x1e8] sm:$0xff] %v1237
    %1499 = vst [vmem:[#allocation10 + $0x1f0] sm:$0xff] %v1241
    %1500 = vst [vmem:[#allocation10 + $0x1f8] sm:$0xff] %v1243
    %1501 = vst [vmem:[#allocation10 + $0x200] sm:$0xff] %v1247
    %1502 = vst [vmem:[#allocation10 + $0x208] sm:$0xff] %v1249
    %1503 = vst [vmem:[#allocation10 + $0x210] sm:$0xff] %v1253
    %1504 = vst [vmem:[#allocation10 + $0x218] sm:$0xff] %v1255
    %1505 = vst [vmem:[#allocation10 + $0x220] sm:$0xff] %v1259
    %1506 = vst [vmem:[#allocation10 + $0x228] sm:$0xff] %v1261
    %1507 = vst [vmem:[#allocation10 + $0x230] sm:$0xff] %v1265
    %1508 = vst [vmem:[#allocation10 + $0x238] sm:$0xff] %v1267
    %1509 = vst [vmem:[#allocation10 + $0x240] sm:$0xff] %v1271
    %1510 = vst [vmem:[#allocation10 + $0x248] sm:$0xff] %v1273
    %1511 = vst [vmem:[#allocation10 + $0x250] sm:$0xff] %v1277
    %1512 = vst [vmem:[#allocation10 + $0x258] sm:$0xff] %v1279
    %1513 = vst [vmem:[#allocation10 + $0x260] sm:$0xff] %v1283
    %1514 = vst [vmem:[#allocation10 + $0x268] sm:$0xff] %v1285
    %1515 = vst [vmem:[#allocation10 + $0x270] sm:$0xff] %v1289
    %1516 = vst [vmem:[#allocation10 + $0x278] sm:$0xff] %v1291
    %1517 = vst [vmem:[#allocation10 + $0x280] sm:$0xff] %v1295
    %1518 = vst [vmem:[#allocation10 + $0x288] sm:$0xff] %v1297
    %1519 = vst [vmem:[#allocation10 + $0x290] sm:$0xff] %v1301
    %1520 = vst [vmem:[#allocation10 + $0x298] sm:$0xff] %v1303
    %1521 = vst [vmem:[#allocation10 + $0x2a0] sm:$0xff] %v1307
    %1522 = vst [vmem:[#allocation10 + $0x2a8] sm:$0xff] %v1309
    %1523 = vst [vmem:[#allocation10 + $0x2b0] sm:$0xff] %v1313
    %1524 = vst [vmem:[#allocation10 + $0x2b8] sm:$0xff] %v1315
    %1525 = vst [vmem:[#allocation10 + $0x2c0] sm:$0xff] %v1319
    %1526 = vst [vmem:[#allocation10 + $0x2c8] sm:$0xff] %v1321
    %1527 = vst [vmem:[#allocation10 + $0x2d0] sm:$0xff] %v1325
    %1528 = vst [vmem:[#allocation10 + $0x2d8] sm:$0xff] %v1327
    %1529 = vst [vmem:[#allocation10 + $0x2e0] sm:$0xff] %v1331
    %1530 = vst [vmem:[#allocation10 + $0x2e8] sm:$0xff] %v1333
    %1531 = vst [vmem:[#allocation10 + $0x2f0] sm:$0xff] %v1337
    %1532 = vst [vmem:[#allocation10 + $0x2f8] sm:$0xff] %v1339
    %1533 = vst [vmem:[#allocation10 + $0x300] sm:$0xff] %v1343
    %1534 = vst [vmem:[#allocation10 + $0x308] sm:$0xff] %v1345
    %1535 = vst [vmem:[#allocation10 + $0x310] sm:$0xff] %v1349
    %1536 = vst [vmem:[#allocation10 + $0x318] sm:$0xff] %v1351
    %1537 = vst [vmem:[#allocation10 + $0x320] sm:$0xff] %v1355
    %1538 = vst [vmem:[#allocation10 + $0x328] sm:$0xff] %v1357
    %1539 = vst [vmem:[#allocation10 + $0x330] sm:$0xff] %v1361
    %1540 = vst [vmem:[#allocation10 + $0x338] sm:$0xff] %v1363
    %1541 = vst [vmem:[#allocation10 + $0x340] sm:$0xff] %v1367
    %1542 = vst [vmem:[#allocation10 + $0x348] sm:$0xff] %v1369
    %1543 = vst [vmem:[#allocation10 + $0x350] sm:$0xff] %v1373
    %1544 = vst [vmem:[#allocation10 + $0x358] sm:$0xff] %v1375
    %1545 = vst [vmem:[#allocation10 + $0x360] sm:$0xff] %v1379
    %1546 = vst [vmem:[#allocation10 + $0x368] sm:$0xff] %v1381
    %1547 = vst [vmem:[#allocation10 + $0x370] sm:$0xff] %v1385
    %1548 = vst [vmem:[#allocation10 + $0x378] sm:$0xff] %v1387
    %1549 = vst [vmem:[#allocation10 + $0x380] sm:$0xff] %v1391
    %1550 = vst [vmem:[#allocation10 + $0x388] sm:$0xff] %v1393
    %1551 = vst [vmem:[#allocation10 + $0x390] sm:$0xff] %v1397
    %1552 = vst [vmem:[#allocation10 + $0x398] sm:$0xff] %v1399
    %1553 = vst [vmem:[#allocation10 + $0x3a0] sm:$0xff] %v1403
    %1554 = vst [vmem:[#allocation10 + $0x3a8] sm:$0xff] %v1405
    %1555 = vst [vmem:[#allocation10 + $0x3b0] sm:$0xff] %v1409
    %1556 = vst [vmem:[#allocation10 + $0x3b8] sm:$0xff] %v1411
    %1557 = vst [vmem:[#allocation10 + $0x3c0] sm:$0xff] %v1415
    %1558 = vst [vmem:[#allocation10 + $0x3c8] sm:$0xff] %v1417
    %1559 = vst [vmem:[#allocation10 + $0x3d0] sm:$0xff] %v1421
    %1560 = vst [vmem:[#allocation10 + $0x3d8] sm:$0xff] %v1423
    %1561 = vst [vmem:[#allocation10 + $0x3e0] sm:$0xff] %v1427
    %1562 = vst [vmem:[#allocation10 + $0x3e8] sm:$0xff] %v1429
    %1563 = vst [vmem:[#allocation10 + $0x3f0] sm:$0xff] %v1433
    %1564 = vst [vmem:[#allocation10 + $0x3f8] sm:$0xff] %v1435
    %s1565 = scalar_lea.vmem [#allocation8], 16
    %v1566 = vld [vmem:[%s1565] sm:$0xff]
    %v1567 = vld [vmem:[%s1565 + $0x8] sm:$0xff]
    %1568 = vxpose.xlu0.b32.start [1/16] %v507, 128
    %1569 = vxpose.xlu0.b32.cont [2/16] 0.0, 128
    %1570 = vxpose.xlu0.b32.cont [3/16] 0.0, 128
    %1571 = vxpose.xlu0.b32.cont [4/16] 0.0, 128
    %1572 = vxpose.xlu0.b32.cont [5/16] 0.0, 128
    %1573 = vxpose.xlu0.b32.cont [6/16] 0.0, 128
    %1574 = vxpose.xlu0.b32.cont [7/16] 0.0, 128
    %1575 = vxpose.xlu0.b32.cont [8/16] 0.0, 128
    %1576 = vxpose.xlu0.b32.cont [9/16] 0.0, 128
    %1577 = vxpose.xlu0.b32.cont [10/16] 0.0, 128
    %1578 = vxpose.xlu0.b32.cont [11/16] 0.0, 128
    %1579 = vxpose.xlu0.b32.cont [12/16] 0.0, 128
    %1580 = vxpose.xlu0.b32.cont [13/16] 0.0, 128
    %1581 = vxpose.xlu0.b32.cont [14/16] 0.0, 128
    %1582 = vxpose.xlu0.b32.cont [15/16] 0.0, 128
    %1583 = vxpose.xlu0.b32.end [16/16] 0.0, 128
    %v1584 = vpop.trf.xlu0
    %v1585 = vpop.trf.xlu0
    %v1586 = vpop.trf.xlu0
    %v1587 = vpop.trf.xlu0
    %v1588 = vpop.trf.xlu0
    %v1589 = vpop.trf.xlu0
    %v1590 = vpop.trf.xlu0
    %v1591 = vpop.trf.xlu0
    %v1592 = vpop.trf.xlu0
    %v1593 = vpop.trf.xlu0
    %v1594 = vpop.trf.xlu0
    %v1595 = vpop.trf.xlu0
    %v1596 = vpop.trf.xlu0
    %v1597 = vpop.trf.xlu0
    %v1598 = vpop.trf.xlu0
    %v1599 = vpop.trf.xlu0
    %1600 = vxpose.xlu0.b32.start [1/16] %v509, 128
    %1601 = vxpose.xlu0.b32.cont [2/16] 0.0, 128
    %1602 = vxpose.xlu0.b32.cont [3/16] 0.0, 128
    %1603 = vxpose.xlu0.b32.cont [4/16] 0.0, 128
    %1604 = vxpose.xlu0.b32.cont [5/16] 0.0, 128
    %1605 = vxpose.xlu0.b32.cont [6/16] 0.0, 128
    %1606 = vxpose.xlu0.b32.cont [7/16] 0.0, 128
    %1607 = vxpose.xlu0.b32.cont [8/16] 0.0, 128
    %1608 = vxpose.xlu0.b32.cont [9/16] 0.0, 128
    %1609 = vxpose.xlu0.b32.cont [10/16] 0.0, 128
    %1610 = vxpose.xlu0.b32.cont [11/16] 0.0, 128
    %1611 = vxpose.xlu0.b32.cont [12/16] 0.0, 128
    %1612 = vxpose.xlu0.b32.cont [13/16] 0.0, 128
    %1613 = vxpose.xlu0.b32.cont [14/16] 0.0, 128
    %1614 = vxpose.xlu0.b32.cont [15/16] 0.0, 128
    %1615 = vxpose.xlu0.b32.end [16/16] 0.0, 128
    %v1616 = vpop.trf.xlu0
    %v1617 = vpop.trf.xlu0
    %v1618 = vpop.trf.xlu0
    %v1619 = vpop.trf.xlu0
    %v1620 = vpop.trf.xlu0
    %v1621 = vpop.trf.xlu0
    %v1622 = vpop.trf.xlu0
    %v1623 = vpop.trf.xlu0
    %v1624 = vpop.trf.xlu0
    %v1625 = vpop.trf.xlu0
    %v1626 = vpop.trf.xlu0
    %v1627 = vpop.trf.xlu0
    %v1628 = vpop.trf.xlu0
    %v1629 = vpop.trf.xlu0
    %v1630 = vpop.trf.xlu0
    %v1631 = vpop.trf.xlu0
    %1632 = vxpose.xlu0.b32.start [1/16] %v661, 128
    %1633 = vxpose.xlu0.b32.cont [2/16] 0.0, 128
    %1634 = vxpose.xlu0.b32.cont [3/16] 0.0, 128
    %1635 = vxpose.xlu0.b32.cont [4/16] 0.0, 128
    %1636 = vxpose.xlu0.b32.cont [5/16] 0.0, 128
    %1637 = vxpose.xlu0.b32.cont [6/16] 0.0, 128
    %1638 = vxpose.xlu0.b32.cont [7/16] 0.0, 128
    %1639 = vxpose.xlu0.b32.cont [8/16] 0.0, 128
    %1640 = vxpose.xlu0.b32.cont [9/16] 0.0, 128
    %1641 = vxpose.xlu0.b32.cont [10/16] 0.0, 128
    %1642 = vxpose.xlu0.b32.cont [11/16] 0.0, 128
    %1643 = vxpose.xlu0.b32.cont [12/16] 0.0, 128
    %1644 = vxpose.xlu0.b32.cont [13/16] 0.0, 128
    %1645 = vxpose.xlu0.b32.cont [14/16] 0.0, 128
    %1646 = vxpose.xlu0.b32.cont [15/16] 0.0, 128
    %1647 = vxpose.xlu0.b32.end [16/16] 0.0, 128
    %v1648 = vpop.trf.xlu0
    %v1649 = vpop.trf.xlu0
    %v1650 = vpop.trf.xlu0
    %v1651 = vpop.trf.xlu0
    %v1652 = vpop.trf.xlu0
    %v1653 = vpop.trf.xlu0
    %v1654 = vpop.trf.xlu0
    %v1655 = vpop.trf.xlu0
    %v1656 = vpop.trf.xlu0
    %v1657 = vpop.trf.xlu0
    %v1658 = vpop.trf.xlu0
    %v1659 = vpop.trf.xlu0
    %v1660 = vpop.trf.xlu0
    %v1661 = vpop.trf.xlu0
    %v1662 = vpop.trf.xlu0
    %v1663 = vpop.trf.xlu0
    %1664 = vxpose.xlu0.b32.start [1/16] %v663, 128
    %1665 = vxpose.xlu0.b32.cont [2/16] 0.0, 128
    %1666 = vxpose.xlu0.b32.cont [3/16] 0.0, 128
    %1667 = vxpose.xlu0.b32.cont [4/16] 0.0, 128
    %1668 = vxpose.xlu0.b32.cont [5/16] 0.0, 128
    %1669 = vxpose.xlu0.b32.cont [6/16] 0.0, 128
    %1670 = vxpose.xlu0.b32.cont [7/16] 0.0, 128
    %1671 = vxpose.xlu0.b32.cont [8/16] 0.0, 128
    %1672 = vxpose.xlu0.b32.cont [9/16] 0.0, 128
    %1673 = vxpose.xlu0.b32.cont [10/16] 0.0, 128
    %1674 = vxpose.xlu0.b32.cont [11/16] 0.0, 128
    %1675 = vxpose.xlu0.b32.cont [12/16] 0.0, 128
    %1676 = vxpose.xlu0.b32.cont [13/16] 0.0, 128
    %1677 = vxpose.xlu0.b32.cont [14/16] 0.0, 128
    %1678 = vxpose.xlu0.b32.cont [15/16] 0.0, 128
    %1679 = vxpose.xlu0.b32.end [16/16] 0.0, 128
    %v1680 = vpop.trf.xlu0
    %v1681 = vpop.trf.xlu0
    %v1682 = vpop.trf.xlu0
    %v1683 = vpop.trf.xlu0
    %v1684 = vpop.trf.xlu0
    %v1685 = vpop.trf.xlu0
    %v1686 = vpop.trf.xlu0
    %v1687 = vpop.trf.xlu0
    %v1688 = vpop.trf.xlu0
    %v1689 = vpop.trf.xlu0
    %v1690 = vpop.trf.xlu0
    %v1691 = vpop.trf.xlu0
    %v1692 = vpop.trf.xlu0
    %v1693 = vpop.trf.xlu0
    %v1694 = vpop.trf.xlu0
    %v1695 = vpop.trf.xlu0
    %v1697 = vsel %vm795, %v1584, 0
    %v1700 = vsel %vm795, %v1585, 0
    %v1703 = vsel %vm795, %v1586, 0
    %v1706 = vsel %vm795, %v1587, 0
    %v1709 = vsel %vm795, %v1588, 0
    %v1712 = vsel %vm795, %v1589, 0
    %v1715 = vsel %vm795, %v1590, 0
    %v1718 = vsel %vm795, %v1591, 0
    %v1721 = vsel %vm795, %v1592, 0
    %v1724 = vsel %vm795, %v1593, 0
    %v1727 = vsel %vm795, %v1594, 0
    %v1730 = vsel %vm795, %v1595, 0
    %v1733 = vsel %vm795, %v1596, 0
    %v1736 = vsel %vm795, %v1597, 0
    %v1739 = vsel %vm795, %v1598, 0
    %v1742 = vsel %vm795, %v1599, 0
    %v1745 = vsel %vm795, %v1616, 0
    %v1748 = vsel %vm795, %v1617, 0
    %v1751 = vsel %vm795, %v1618, 0
    %v1754 = vsel %vm795, %v1619, 0
    %v1757 = vsel %vm795, %v1620, 0
    %v1760 = vsel %vm795, %v1621, 0
    %v1763 = vsel %vm795, %v1622, 0
    %v1766 = vsel %vm795, %v1623, 0
    %v1769 = vsel %vm795, %v1624, 0
    %v1772 = vsel %vm795, %v1625, 0
    %v1775 = vsel %vm795, %v1626, 0
    %v1778 = vsel %vm795, %v1627, 0
    %v1781 = vsel %vm795, %v1628, 0
    %v1784 = vsel %vm795, %v1629, 0
    %v1787 = vsel %vm795, %v1630, 0
    %v1790 = vsel %vm795, %v1631, 0
    %v1793 = vsel %vm795, %v1648, 0
    %v1796 = vsel %vm795, %v1649, 0
    %v1799 = vsel %vm795, %v1650, 0
    %v1802 = vsel %vm795, %v1651, 0
    %v1805 = vsel %vm795, %v1652, 0
    %v1808 = vsel %vm795, %v1653, 0
    %v1811 = vsel %vm795, %v1654, 0
    %v1814 = vsel %vm795, %v1655, 0
    %v1817 = vsel %vm795, %v1656, 0
    %v1820 = vsel %vm795, %v1657, 0
    %v1823 = vsel %vm795, %v1658, 0
    %v1826 = vsel %vm795, %v1659, 0
    %v1829 = vsel %vm795, %v1660, 0
    %v1832 = vsel %vm795, %v1661, 0
    %v1835 = vsel %vm795, %v1662, 0
    %v1838 = vsel %vm795, %v1663, 0
    %v1841 = vsel %vm795, %v1680, 0
    %v1844 = vsel %vm795, %v1681, 0
    %v1847 = vsel %vm795, %v1682, 0
    %v1850 = vsel %vm795, %v1683, 0
    %v1853 = vsel %vm795, %v1684, 0
    %v1856 = vsel %vm795, %v1685, 0
    %v1859 = vsel %vm795, %v1686, 0
    %v1862 = vsel %vm795, %v1687, 0
    %v1865 = vsel %vm795, %v1688, 0
    %v1868 = vsel %vm795, %v1689, 0
    %v1871 = vsel %vm795, %v1690, 0
    %v1874 = vsel %vm795, %v1691, 0
    %v1877 = vsel %vm795, %v1692, 0
    %v1880 = vsel %vm795, %v1693, 0
    %v1883 = vsel %vm795, %v1694, 0
    %v1886 = vsel %vm795, %v1695, 0
    %1888 = vmatprep.subr.mxu0 0.0
    %1889 = vmatpush1.msra.mxu0 0.0
    %1890 = vmatprep.subr.mxu0 0.0
    %1891 = vmatpush1.msra.mxu0 0.0
    %1892 = vmatprep.subr.mxu0 0.0
    %1893 = vmatpush1.msra.mxu0 0.0
    %1894 = vmatprep.subr.mxu0 0.0
    %1895 = vmatpush1.msra.mxu0 0.0
    %1896 = vmatprep.subr.mxu0 0.0
    %1897 = vmatpush1.msra.mxu0 0.0
    %1898 = vmatprep.subr.mxu0 0.0
    %1899 = vmatpush1.msra.mxu0 0.0
    %1900 = vmatprep.subr.mxu0 0.0
    %1901 = vmatpush1.msra.mxu0 0.0
    %1902 = vmatprep.subr.mxu0 0.0
    %1903 = vmatpush1.msra.mxu0 0.0
    %1904 = vmatprep.subr.mxu0 0.0
    %1905 = vmatpush1.msra.mxu0 0.0
    %1906 = vmatprep.subr.mxu0 0.0
    %1907 = vmatpush1.msra.mxu0 0.0
    %1908 = vmatprep.subr.mxu0 0.0
    %1909 = vmatpush1.msra.mxu0 0.0
    %1910 = vmatprep.subr.mxu0 0.0
    %1911 = vmatpush1.msra.mxu0 0.0
    %1912 = vmatprep.subr.mxu0 0.0
    %1913 = vmatpush1.msra.mxu0 0.0
    %1914 = vmatprep.subr.mxu0 0.0
    %1915 = vmatpush1.msra.mxu0 0.0
    %1916 = vmatprep.subr.mxu0 0.0
    %1917 = vmatpush1.msra.mxu0 0.0
    %1918 = vmatprep.subr.mxu0 %v1567
    %1919 = vmatpush1.msra.mxu0 %v1566
    %1920 = vmatprep.subr.mxu0 0.0
    %1921 = vmatpush2.msra.mxu0 0.0
    %1922 = vmatprep.subr.mxu0 0.0
    %1923 = vmatpush2.msra.mxu0 0.0
    %1924 = vmatprep.subr.mxu0 0.0
    %1925 = vmatpush2.msra.mxu0 0.0
    %1926 = vmatprep.subr.mxu0 0.0
    %1927 = vmatpush2.msra.mxu0 0.0
    %1928 = vmatprep.subr.mxu0 0.0
    %1929 = vmatpush2.msra.mxu0 0.0
    %1930 = vmatprep.subr.mxu0 0.0
    %1931 = vmatpush2.msra.mxu0 0.0
    %1932 = vmatprep.subr.mxu0 0.0
    %1933 = vmatpush2.msra.mxu0 0.0
    %1934 = vmatprep.subr.mxu0 0.0
    %1935 = vmatpush2.msra.mxu0 0.0
    %1936 = vmatprep.subr.mxu0 0.0
    %1937 = vmatpush2.msra.mxu0 0.0
    %1938 = vmatprep.subr.mxu0 0.0
    %1939 = vmatpush2.msra.mxu0 0.0
    %1940 = vmatprep.subr.mxu0 0.0
    %1941 = vmatpush2.msra.mxu0 0.0
    %1942 = vmatprep.subr.mxu0 0.0
    %1943 = vmatpush2.msra.mxu0 0.0
    %1944 = vmatprep.subr.mxu0 0.0
    %1945 = vmatpush2.msra.mxu0 0.0
    %1946 = vmatprep.subr.mxu0 0.0
    %1947 = vmatpush2.msra.mxu0 0.0
    %1948 = vmatprep.subr.mxu0 0.0
    %1949 = vmatpush2.msra.mxu0 0.0
    %1950 = vmatprep.subr.mxu0 0.0
    %1951 = vmatpush2.msra.mxu0 0.0
    %1952 = vmatprep.mubr.f32.mxu0 0.0
    %1953 = vmatmul.mubr.f32.gmra.mxu0 %v1697
    %v1954 = vpop.f32.mrf.mxu0
    %v1955 = vadd.f32 0.0, %v1954
    %v1956 = vpop.f32.mrf.mxu0
    %v1957 = vadd.f32 0.0, %v1956
    %1958 = vmatprep.mubr.f32.mxu0 0.0
    %1959 = vmatmul.mubr.f32.gmra.mxu0 %v1700
    %v1960 = vpop.f32.mrf.mxu0
    %v1961 = vadd.f32 0.0, %v1960
    %v1962 = vpop.f32.mrf.mxu0
    %v1963 = vadd.f32 0.0, %v1962
    %1964 = vmatprep.mubr.f32.mxu0 0.0
    %1965 = vmatmul.mubr.f32.gmra.mxu0 %v1703
    %v1966 = vpop.f32.mrf.mxu0
    %v1967 = vadd.f32 0.0, %v1966
    %v1968 = vpop.f32.mrf.mxu0
    %v1969 = vadd.f32 0.0, %v1968
    %1970 = vmatprep.mubr.f32.mxu0 0.0
    %1971 = vmatmul.mubr.f32.gmra.mxu0 %v1706
    %v1972 = vpop.f32.mrf.mxu0
    %v1973 = vadd.f32 0.0, %v1972
    %v1974 = vpop.f32.mrf.mxu0
    %v1975 = vadd.f32 0.0, %v1974
    %1976 = vmatprep.mubr.f32.mxu0 0.0
    %1977 = vmatmul.mubr.f32.gmra.mxu0 %v1709
    %v1978 = vpop.f32.mrf.mxu0
    %v1979 = vadd.f32 0.0, %v1978
    %v1980 = vpop.f32.mrf.mxu0
    %v1981 = vadd.f32 0.0, %v1980
    %1982 = vmatprep.mubr.f32.mxu0 0.0
    %1983 = vmatmul.mubr.f32.gmra.mxu0 %v1712
    %v1984 = vpop.f32.mrf.mxu0
    %v1985 = vadd.f32 0.0, %v1984
    %v1986 = vpop.f32.mrf.mxu0
    %v1987 = vadd.f32 0.0, %v1986
    %1988 = vmatprep.mubr.f32.mxu0 0.0
    %1989 = vmatmul.mubr.f32.gmra.mxu0 %v1715
    %v1990 = vpop.f32.mrf.mxu0
    %v1991 = vadd.f32 0.0, %v1990
    %v1992 = vpop.f32.mrf.mxu0
    %v1993 = vadd.f32 0.0, %v1992
    %1994 = vmatprep.mubr.f32.mxu0 0.0
    %1995 = vmatmul.mubr.f32.gmra.mxu0 %v1718
    %v1996 = vpop.f32.mrf.mxu0
    %v1997 = vadd.f32 0.0, %v1996
    %v1998 = vpop.f32.mrf.mxu0
    %v1999 = vadd.f32 0.0, %v1998
    %2000 = vmatprep.mubr.f32.mxu0 0.0
    %2001 = vmatmul.mubr.f32.gmra.mxu0 %v1721
    %v2002 = vpop.f32.mrf.mxu0
    %v2003 = vadd.f32 0.0, %v2002
    %v2004 = vpop.f32.mrf.mxu0
    %v2005 = vadd.f32 0.0, %v2004
    %2006 = vmatprep.mubr.f32.mxu0 0.0
    %2007 = vmatmul.mubr.f32.gmra.mxu0 %v1724
    %v2008 = vpop.f32.mrf.mxu0
    %v2009 = vadd.f32 0.0, %v2008
    %v2010 = vpop.f32.mrf.mxu0
    %v2011 = vadd.f32 0.0, %v2010
    %2012 = vmatprep.mubr.f32.mxu0 0.0
    %2013 = vmatmul.mubr.f32.gmra.mxu0 %v1727
    %v2014 = vpop.f32.mrf.mxu0
    %v2015 = vadd.f32 0.0, %v2014
    %v2016 = vpop.f32.mrf.mxu0
    %v2017 = vadd.f32 0.0, %v2016
    %2018 = vmatprep.mubr.f32.mxu0 0.0
    %2019 = vmatmul.mubr.f32.gmra.mxu0 %v1730
    %v2020 = vpop.f32.mrf.mxu0
    %v2021 = vadd.f32 0.0, %v2020
    %v2022 = vpop.f32.mrf.mxu0
    %v2023 = vadd.f32 0.0, %v2022
    %2024 = vmatprep.mubr.f32.mxu0 0.0
    %2025 = vmatmul.mubr.f32.gmra.mxu0 %v1733
    %v2026 = vpop.f32.mrf.mxu0
    %v2027 = vadd.f32 0.0, %v2026
    %v2028 = vpop.f32.mrf.mxu0
    %v2029 = vadd.f32 0.0, %v2028
    %2030 = vmatprep.mubr.f32.mxu0 0.0
    %2031 = vmatmul.mubr.f32.gmra.mxu0 %v1736
    %v2032 = vpop.f32.mrf.mxu0
    %v2033 = vadd.f32 0.0, %v2032
    %v2034 = vpop.f32.mrf.mxu0
    %v2035 = vadd.f32 0.0, %v2034
    %2036 = vmatprep.mubr.f32.mxu0 0.0
    %2037 = vmatmul.mubr.f32.gmra.mxu0 %v1739
    %v2038 = vpop.f32.mrf.mxu0
    %v2039 = vadd.f32 0.0, %v2038
    %v2040 = vpop.f32.mrf.mxu0
    %v2041 = vadd.f32 0.0, %v2040
    %2042 = vmatprep.mubr.f32.mxu0 0.0
    %2043 = vmatmul.mubr.f32.gmra.mxu0 %v1742
    %v2044 = vpop.f32.mrf.mxu0
    %v2045 = vadd.f32 0.0, %v2044
    %v2046 = vpop.f32.mrf.mxu0
    %v2047 = vadd.f32 0.0, %v2046
    %2048 = vmatprep.mubr.f32.mxu0 0.0
    %2049 = vmatmul.mubr.f32.gmra.mxu0 %v1745
    %v2050 = vpop.f32.mrf.mxu0
    %v2051 = vadd.f32 0.0, %v2050
    %v2052 = vpop.f32.mrf.mxu0
    %v2053 = vadd.f32 0.0, %v2052
    %2054 = vmatprep.mubr.f32.mxu0 0.0
    %2055 = vmatmul.mubr.f32.gmra.mxu0 %v1748
    %v2056 = vpop.f32.mrf.mxu0
    %v2057 = vadd.f32 0.0, %v2056
    %v2058 = vpop.f32.mrf.mxu0
    %v2059 = vadd.f32 0.0, %v2058
    %2060 = vmatprep.mubr.f32.mxu0 0.0
    %2061 = vmatmul.mubr.f32.gmra.mxu0 %v1751
    %v2062 = vpop.f32.mrf.mxu0
    %v2063 = vadd.f32 0.0, %v2062
    %v2064 = vpop.f32.mrf.mxu0
    %v2065 = vadd.f32 0.0, %v2064
    %2066 = vmatprep.mubr.f32.mxu0 0.0
    %2067 = vmatmul.mubr.f32.gmra.mxu0 %v1754
    %v2068 = vpop.f32.mrf.mxu0
    %v2069 = vadd.f32 0.0, %v2068
    %v2070 = vpop.f32.mrf.mxu0
    %v2071 = vadd.f32 0.0, %v2070
    %2072 = vmatprep.mubr.f32.mxu0 0.0
    %2073 = vmatmul.mubr.f32.gmra.mxu0 %v1757
    %v2074 = vpop.f32.mrf.mxu0
    %v2075 = vadd.f32 0.0, %v2074
    %v2076 = vpop.f32.mrf.mxu0
    %v2077 = vadd.f32 0.0, %v2076
    %2078 = vmatprep.mubr.f32.mxu0 0.0
    %2079 = vmatmul.mubr.f32.gmra.mxu0 %v1760
    %v2080 = vpop.f32.mrf.mxu0
    %v2081 = vadd.f32 0.0, %v2080
    %v2082 = vpop.f32.mrf.mxu0
    %v2083 = vadd.f32 0.0, %v2082
    %2084 = vmatprep.mubr.f32.mxu0 0.0
    %2085 = vmatmul.mubr.f32.gmra.mxu0 %v1763
    %v2086 = vpop.f32.mrf.mxu0
    %v2087 = vadd.f32 0.0, %v2086
    %v2088 = vpop.f32.mrf.mxu0
    %v2089 = vadd.f32 0.0, %v2088
    %2090 = vmatprep.mubr.f32.mxu0 0.0
    %2091 = vmatmul.mubr.f32.gmra.mxu0 %v1766
    %v2092 = vpop.f32.mrf.mxu0
    %v2093 = vadd.f32 0.0, %v2092
    %v2094 = vpop.f32.mrf.mxu0
    %v2095 = vadd.f32 0.0, %v2094
    %2096 = vmatprep.mubr.f32.mxu0 0.0
    %2097 = vmatmul.mubr.f32.gmra.mxu0 %v1769
    %v2098 = vpop.f32.mrf.mxu0
    %v2099 = vadd.f32 0.0, %v2098
    %v2100 = vpop.f32.mrf.mxu0
    %v2101 = vadd.f32 0.0, %v2100
    %2102 = vmatprep.mubr.f32.mxu0 0.0
    %2103 = vmatmul.mubr.f32.gmra.mxu0 %v1772
    %v2104 = vpop.f32.mrf.mxu0
    %v2105 = vadd.f32 0.0, %v2104
    %v2106 = vpop.f32.mrf.mxu0
    %v2107 = vadd.f32 0.0, %v2106
    %2108 = vmatprep.mubr.f32.mxu0 0.0
    %2109 = vmatmul.mubr.f32.gmra.mxu0 %v1775
    %v2110 = vpop.f32.mrf.mxu0
    %v2111 = vadd.f32 0.0, %v2110
    %v2112 = vpop.f32.mrf.mxu0
    %v2113 = vadd.f32 0.0, %v2112
    %2114 = vmatprep.mubr.f32.mxu0 0.0
    %2115 = vmatmul.mubr.f32.gmra.mxu0 %v1778
    %v2116 = vpop.f32.mrf.mxu0
    %v2117 = vadd.f32 0.0, %v2116
    %v2118 = vpop.f32.mrf.mxu0
    %v2119 = vadd.f32 0.0, %v2118
    %2120 = vmatprep.mubr.f32.mxu0 0.0
    %2121 = vmatmul.mubr.f32.gmra.mxu0 %v1781
    %v2122 = vpop.f32.mrf.mxu0
    %v2123 = vadd.f32 0.0, %v2122
    %v2124 = vpop.f32.mrf.mxu0
    %v2125 = vadd.f32 0.0, %v2124
    %2126 = vmatprep.mubr.f32.mxu0 0.0
    %2127 = vmatmul.mubr.f32.gmra.mxu0 %v1784
    %v2128 = vpop.f32.mrf.mxu0
    %v2129 = vadd.f32 0.0, %v2128
    %v2130 = vpop.f32.mrf.mxu0
    %v2131 = vadd.f32 0.0, %v2130
    %2132 = vmatprep.mubr.f32.mxu0 0.0
    %2133 = vmatmul.mubr.f32.gmra.mxu0 %v1787
    %v2134 = vpop.f32.mrf.mxu0
    %v2135 = vadd.f32 0.0, %v2134
    %v2136 = vpop.f32.mrf.mxu0
    %v2137 = vadd.f32 0.0, %v2136
    %2138 = vmatprep.mubr.f32.mxu0 0.0
    %2139 = vmatmul.mubr.f32.gmra.mxu0 %v1790
    %v2140 = vpop.f32.mrf.mxu0
    %v2141 = vadd.f32 0.0, %v2140
    %v2142 = vpop.f32.mrf.mxu0
    %v2143 = vadd.f32 0.0, %v2142
    %2144 = vmatprep.mubr.f32.mxu0 0.0
    %2145 = vmatmul.mubr.f32.gmra.mxu0 %v1793
    %v2146 = vpop.f32.mrf.mxu0
    %v2147 = vadd.f32 0.0, %v2146
    %v2148 = vpop.f32.mrf.mxu0
    %v2149 = vadd.f32 0.0, %v2148
    %2150 = vmatprep.mubr.f32.mxu0 0.0
    %2151 = vmatmul.mubr.f32.gmra.mxu0 %v1796
    %v2152 = vpop.f32.mrf.mxu0
    %v2153 = vadd.f32 0.0, %v2152
    %v2154 = vpop.f32.mrf.mxu0
    %v2155 = vadd.f32 0.0, %v2154
    %2156 = vmatprep.mubr.f32.mxu0 0.0
    %2157 = vmatmul.mubr.f32.gmra.mxu0 %v1799
    %v2158 = vpop.f32.mrf.mxu0
    %v2159 = vadd.f32 0.0, %v2158
    %v2160 = vpop.f32.mrf.mxu0
    %v2161 = vadd.f32 0.0, %v2160
    %2162 = vmatprep.mubr.f32.mxu0 0.0
    %2163 = vmatmul.mubr.f32.gmra.mxu0 %v1802
    %v2164 = vpop.f32.mrf.mxu0
    %v2165 = vadd.f32 0.0, %v2164
    %v2166 = vpop.f32.mrf.mxu0
    %v2167 = vadd.f32 0.0, %v2166
    %2168 = vmatprep.mubr.f32.mxu0 0.0
    %2169 = vmatmul.mubr.f32.gmra.mxu0 %v1805
    %v2170 = vpop.f32.mrf.mxu0
    %v2171 = vadd.f32 0.0, %v2170
    %v2172 = vpop.f32.mrf.mxu0
    %v2173 = vadd.f32 0.0, %v2172
    %2174 = vmatprep.mubr.f32.mxu0 0.0
    %2175 = vmatmul.mubr.f32.gmra.mxu0 %v1808
    %v2176 = vpop.f32.mrf.mxu0
    %v2177 = vadd.f32 0.0, %v2176
    %v2178 = vpop.f32.mrf.mxu0
    %v2179 = vadd.f32 0.0, %v2178
    %2180 = vmatprep.mubr.f32.mxu0 0.0
    %2181 = vmatmul.mubr.f32.gmra.mxu0 %v1811
    %v2182 = vpop.f32.mrf.mxu0
    %v2183 = vadd.f32 0.0, %v2182
    %v2184 = vpop.f32.mrf.mxu0
    %v2185 = vadd.f32 0.0, %v2184
    %2186 = vmatprep.mubr.f32.mxu0 0.0
    %2187 = vmatmul.mubr.f32.gmra.mxu0 %v1814
    %v2188 = vpop.f32.mrf.mxu0
    %v2189 = vadd.f32 0.0, %v2188
    %v2190 = vpop.f32.mrf.mxu0
    %v2191 = vadd.f32 0.0, %v2190
    %2192 = vmatprep.mubr.f32.mxu0 0.0
    %2193 = vmatmul.mubr.f32.gmra.mxu0 %v1817
    %v2194 = vpop.f32.mrf.mxu0
    %v2195 = vadd.f32 0.0, %v2194
    %v2196 = vpop.f32.mrf.mxu0
    %v2197 = vadd.f32 0.0, %v2196
    %2198 = vmatprep.mubr.f32.mxu0 0.0
    %2199 = vmatmul.mubr.f32.gmra.mxu0 %v1820
    %v2200 = vpop.f32.mrf.mxu0
    %v2201 = vadd.f32 0.0, %v2200
    %v2202 = vpop.f32.mrf.mxu0
    %v2203 = vadd.f32 0.0, %v2202
    %2204 = vmatprep.mubr.f32.mxu0 0.0
    %2205 = vmatmul.mubr.f32.gmra.mxu0 %v1823
    %v2206 = vpop.f32.mrf.mxu0
    %v2207 = vadd.f32 0.0, %v2206
    %v2208 = vpop.f32.mrf.mxu0
    %v2209 = vadd.f32 0.0, %v2208
    %2210 = vmatprep.mubr.f32.mxu0 0.0
    %2211 = vmatmul.mubr.f32.gmra.mxu0 %v1826
    %v2212 = vpop.f32.mrf.mxu0
    %v2213 = vadd.f32 0.0, %v2212
    %v2214 = vpop.f32.mrf.mxu0
    %v2215 = vadd.f32 0.0, %v2214
    %2216 = vmatprep.mubr.f32.mxu0 0.0
    %2217 = vmatmul.mubr.f32.gmra.mxu0 %v1829
    %v2218 = vpop.f32.mrf.mxu0
    %v2219 = vadd.f32 0.0, %v2218
    %v2220 = vpop.f32.mrf.mxu0
    %v2221 = vadd.f32 0.0, %v2220
    %2222 = vmatprep.mubr.f32.mxu0 0.0
    %2223 = vmatmul.mubr.f32.gmra.mxu0 %v1832
    %v2224 = vpop.f32.mrf.mxu0
    %v2225 = vadd.f32 0.0, %v2224
    %v2226 = vpop.f32.mrf.mxu0
    %v2227 = vadd.f32 0.0, %v2226
    %2228 = vmatprep.mubr.f32.mxu0 0.0
    %2229 = vmatmul.mubr.f32.gmra.mxu0 %v1835
    %v2230 = vpop.f32.mrf.mxu0
    %v2231 = vadd.f32 0.0, %v2230
    %v2232 = vpop.f32.mrf.mxu0
    %v2233 = vadd.f32 0.0, %v2232
    %2234 = vmatprep.mubr.f32.mxu0 0.0
    %2235 = vmatmul.mubr.f32.gmra.mxu0 %v1838
    %v2236 = vpop.f32.mrf.mxu0
    %v2237 = vadd.f32 0.0, %v2236
    %v2238 = vpop.f32.mrf.mxu0
    %v2239 = vadd.f32 0.0, %v2238
    %2240 = vmatprep.mubr.f32.mxu0 0.0
    %2241 = vmatmul.mubr.f32.gmra.mxu0 %v1841
    %v2242 = vpop.f32.mrf.mxu0
    %v2243 = vadd.f32 0.0, %v2242
    %v2244 = vpop.f32.mrf.mxu0
    %v2245 = vadd.f32 0.0, %v2244
    %2246 = vmatprep.mubr.f32.mxu0 0.0
    %2247 = vmatmul.mubr.f32.gmra.mxu0 %v1844
    %v2248 = vpop.f32.mrf.mxu0
    %v2249 = vadd.f32 0.0, %v2248
    %v2250 = vpop.f32.mrf.mxu0
    %v2251 = vadd.f32 0.0, %v2250
    %2252 = vmatprep.mubr.f32.mxu0 0.0
    %2253 = vmatmul.mubr.f32.gmra.mxu0 %v1847
    %v2254 = vpop.f32.mrf.mxu0
    %v2255 = vadd.f32 0.0, %v2254
    %v2256 = vpop.f32.mrf.mxu0
    %v2257 = vadd.f32 0.0, %v2256
    %2258 = vmatprep.mubr.f32.mxu0 0.0
    %2259 = vmatmul.mubr.f32.gmra.mxu0 %v1850
    %v2260 = vpop.f32.mrf.mxu0
    %v2261 = vadd.f32 0.0, %v2260
    %v2262 = vpop.f32.mrf.mxu0
    %v2263 = vadd.f32 0.0, %v2262
    %2264 = vmatprep.mubr.f32.mxu0 0.0
    %2265 = vmatmul.mubr.f32.gmra.mxu0 %v1853
    %v2266 = vpop.f32.mrf.mxu0
    %v2267 = vadd.f32 0.0, %v2266
    %v2268 = vpop.f32.mrf.mxu0
    %v2269 = vadd.f32 0.0, %v2268
    %2270 = vmatprep.mubr.f32.mxu0 0.0
    %2271 = vmatmul.mubr.f32.gmra.mxu0 %v1856
    %v2272 = vpop.f32.mrf.mxu0
    %v2273 = vadd.f32 0.0, %v2272
    %v2274 = vpop.f32.mrf.mxu0
    %v2275 = vadd.f32 0.0, %v2274
    %2276 = vmatprep.mubr.f32.mxu0 0.0
    %2277 = vmatmul.mubr.f32.gmra.mxu0 %v1859
    %v2278 = vpop.f32.mrf.mxu0
    %v2279 = vadd.f32 0.0, %v2278
    %v2280 = vpop.f32.mrf.mxu0
    %v2281 = vadd.f32 0.0, %v2280
    %2282 = vmatprep.mubr.f32.mxu0 0.0
    %2283 = vmatmul.mubr.f32.gmra.mxu0 %v1862
    %v2284 = vpop.f32.mrf.mxu0
    %v2285 = vadd.f32 0.0, %v2284
    %v2286 = vpop.f32.mrf.mxu0
    %v2287 = vadd.f32 0.0, %v2286
    %2288 = vmatprep.mubr.f32.mxu0 0.0
    %2289 = vmatmul.mubr.f32.gmra.mxu0 %v1865
    %v2290 = vpop.f32.mrf.mxu0
    %v2291 = vadd.f32 0.0, %v2290
    %v2292 = vpop.f32.mrf.mxu0
    %v2293 = vadd.f32 0.0, %v2292
    %2294 = vmatprep.mubr.f32.mxu0 0.0
    %2295 = vmatmul.mubr.f32.gmra.mxu0 %v1868
    %v2296 = vpop.f32.mrf.mxu0
    %v2297 = vadd.f32 0.0, %v2296
    %v2298 = vpop.f32.mrf.mxu0
    %v2299 = vadd.f32 0.0, %v2298
    %2300 = vmatprep.mubr.f32.mxu0 0.0
    %2301 = vmatmul.mubr.f32.gmra.mxu0 %v1871
    %v2302 = vpop.f32.mrf.mxu0
    %v2303 = vadd.f32 0.0, %v2302
    %v2304 = vpop.f32.mrf.mxu0
    %v2305 = vadd.f32 0.0, %v2304
    %2306 = vmatprep.mubr.f32.mxu0 0.0
    %2307 = vmatmul.mubr.f32.gmra.mxu0 %v1874
    %v2308 = vpop.f32.mrf.mxu0
    %v2309 = vadd.f32 0.0, %v2308
    %v2310 = vpop.f32.mrf.mxu0
    %v2311 = vadd.f32 0.0, %v2310
    %2312 = vmatprep.mubr.f32.mxu0 0.0
    %2313 = vmatmul.mubr.f32.gmra.mxu0 %v1877
    %v2314 = vpop.f32.mrf.mxu0
    %v2315 = vadd.f32 0.0, %v2314
    %v2316 = vpop.f32.mrf.mxu0
    %v2317 = vadd.f32 0.0, %v2316
    %2318 = vmatprep.mubr.f32.mxu0 0.0
    %2319 = vmatmul.mubr.f32.gmra.mxu0 %v1880
    %v2320 = vpop.f32.mrf.mxu0
    %v2321 = vadd.f32 0.0, %v2320
    %v2322 = vpop.f32.mrf.mxu0
    %v2323 = vadd.f32 0.0, %v2322
    %2324 = vmatprep.mubr.f32.mxu0 0.0
    %2325 = vmatmul.mubr.f32.gmra.mxu0 %v1883
    %v2326 = vpop.f32.mrf.mxu0
    %v2327 = vadd.f32 0.0, %v2326
    %v2328 = vpop.f32.mrf.mxu0
    %v2329 = vadd.f32 0.0, %v2328
    %2330 = vmatprep.mubr.f32.mxu0 0.0
    %2331 = vmatmul.mubr.f32.gmra.mxu0 %v1886
    %v2332 = vpop.f32.mrf.mxu0
    %v2333 = vadd.f32 0.0, %v2332
    %v2334 = vpop.f32.mrf.mxu0
    %v2335 = vadd.f32 0.0, %v2334
    %2336 = vdwg.mxu0
    %s2337 = scalar_lea.vmem [#allocation10], 1024
    %2338 = vst [vmem:[%s2337] sm:$0xff] %v1955
    %2339 = vst [vmem:[%s2337 + $0x8] sm:$0xff] %v1957
    %2340 = vst [vmem:[%s2337 + $0x10] sm:$0xff] %v1961
    %2341 = vst [vmem:[%s2337 + $0x18] sm:$0xff] %v1963
    %2342 = vst [vmem:[%s2337 + $0x20] sm:$0xff] %v1967
    %2343 = vst [vmem:[%s2337 + $0x28] sm:$0xff] %v1969
    %2344 = vst [vmem:[%s2337 + $0x30] sm:$0xff] %v1973
    %2345 = vst [vmem:[%s2337 + $0x38] sm:$0xff] %v1975
    %2346 = vst [vmem:[%s2337 + $0x40] sm:$0xff] %v1979
    %2347 = vst [vmem:[%s2337 + $0x48] sm:$0xff] %v1981
    %2348 = vst [vmem:[%s2337 + $0x50] sm:$0xff] %v1985
    %2349 = vst [vmem:[%s2337 + $0x58] sm:$0xff] %v1987
    %2350 = vst [vmem:[%s2337 + $0x60] sm:$0xff] %v1991
    %2351 = vst [vmem:[%s2337 + $0x68] sm:$0xff] %v1993
    %2352 = vst [vmem:[%s2337 + $0x70] sm:$0xff] %v1997
    %2353 = vst [vmem:[%s2337 + $0x78] sm:$0xff] %v1999
    %2354 = vst [vmem:[%s2337 + $0x80] sm:$0xff] %v2003
    %2355 = vst [vmem:[%s2337 + $0x88] sm:$0xff] %v2005
    %2356 = vst [vmem:[%s2337 + $0x90] sm:$0xff] %v2009
    %2357 = vst [vmem:[%s2337 + $0x98] sm:$0xff] %v2011
    %2358 = vst [vmem:[%s2337 + $0xa0] sm:$0xff] %v2015
    %2359 = vst [vmem:[%s2337 + $0xa8] sm:$0xff] %v2017
    %2360 = vst [vmem:[%s2337 + $0xb0] sm:$0xff] %v2021
    %2361 = vst [vmem:[%s2337 + $0xb8] sm:$0xff] %v2023
    %2362 = vst [vmem:[%s2337 + $0xc0] sm:$0xff] %v2027
    %2363 = vst [vmem:[%s2337 + $0xc8] sm:$0xff] %v2029
    %2364 = vst [vmem:[%s2337 + $0xd0] sm:$0xff] %v2033
    %2365 = vst [vmem:[%s2337 + $0xd8] sm:$0xff] %v2035
    %2366 = vst [vmem:[%s2337 + $0xe0] sm:$0xff] %v2039
    %2367 = vst [vmem:[%s2337 + $0xe8] sm:$0xff] %v2041
    %2368 = vst [vmem:[%s2337 + $0xf0] sm:$0xff] %v2045
    %2369 = vst [vmem:[%s2337 + $0xf8] sm:$0xff] %v2047
    %2370 = vst [vmem:[%s2337 + $0x100] sm:$0xff] %v2051
    %2371 = vst [vmem:[%s2337 + $0x108] sm:$0xff] %v2053
    %2372 = vst [vmem:[%s2337 + $0x110] sm:$0xff] %v2057
    %2373 = vst [vmem:[%s2337 + $0x118] sm:$0xff] %v2059
    %2374 = vst [vmem:[%s2337 + $0x120] sm:$0xff] %v2063
    %2375 = vst [vmem:[%s2337 + $0x128] sm:$0xff] %v2065
    %2376 = vst [vmem:[%s2337 + $0x130] sm:$0xff] %v2069
    %2377 = vst [vmem:[%s2337 + $0x138] sm:$0xff] %v2071
    %2378 = vst [vmem:[%s2337 + $0x140] sm:$0xff] %v2075
    %2379 = vst [vmem:[%s2337 + $0x148] sm:$0xff] %v2077
    %2380 = vst [vmem:[%s2337 + $0x150] sm:$0xff] %v2081
    %2381 = vst [vmem:[%s2337 + $0x158] sm:$0xff] %v2083
    %2382 = vst [vmem:[%s2337 + $0x160] sm:$0xff] %v2087
    %2383 = vst [vmem:[%s2337 + $0x168] sm:$0xff] %v2089
    %2384 = vst [vmem:[%s2337 + $0x170] sm:$0xff] %v2093
    %2385 = vst [vmem:[%s2337 + $0x178] sm:$0xff] %v2095
    %2386 = vst [vmem:[%s2337 + $0x180] sm:$0xff] %v2099
    %2387 = vst [vmem:[%s2337 + $0x188] sm:$0xff] %v2101
    %2388 = vst [vmem:[%s2337 + $0x190] sm:$0xff] %v2105
    %2389 = vst [vmem:[%s2337 + $0x198] sm:$0xff] %v2107
    %2390 = vst [vmem:[%s2337 + $0x1a0] sm:$0xff] %v2111
    %2391 = vst [vmem:[%s2337 + $0x1a8] sm:$0xff] %v2113
    %2392 = vst [vmem:[%s2337 + $0x1b0] sm:$0xff] %v2117
    %2393 = vst [vmem:[%s2337 + $0x1b8] sm:$0xff] %v2119
    %2394 = vst [vmem:[%s2337 + $0x1c0] sm:$0xff] %v2123
    %2395 = vst [vmem:[%s2337 + $0x1c8] sm:$0xff] %v2125
    %2396 = vst [vmem:[%s2337 + $0x1d0] sm:$0xff] %v2129
    %2397 = vst [vmem:[%s2337 + $0x1d8] sm:$0xff] %v2131
    %2398 = vst [vmem:[%s2337 + $0x1e0] sm:$0xff] %v2135
    %2399 = vst [vmem:[%s2337 + $0x1e8] sm:$0xff] %v2137
    %2400 = vst [vmem:[%s2337 + $0x1f0] sm:$0xff] %v2141
    %2401 = vst [vmem:[%s2337 + $0x1f8] sm:$0xff] %v2143
    %2402 = vst [vmem:[%s2337 + $0x200] sm:$0xff] %v2147
    %2403 = vst [vmem:[%s2337 + $0x208] sm:$0xff] %v2149
    %2404 = vst [vmem:[%s2337 + $0x210] sm:$0xff] %v2153
    %2405 = vst [vmem:[%s2337 + $0x218] sm:$0xff] %v2155
    %2406 = vst [vmem:[%s2337 + $0x220] sm:$0xff] %v2159
    %2407 = vst [vmem:[%s2337 + $0x228] sm:$0xff] %v2161
    %2408 = vst [vmem:[%s2337 + $0x230] sm:$0xff] %v2165
    %2409 = vst [vmem:[%s2337 + $0x238] sm:$0xff] %v2167
    %2410 = vst [vmem:[%s2337 + $0x240] sm:$0xff] %v2171
    %2411 = vst [vmem:[%s2337 + $0x248] sm:$0xff] %v2173
    %2412 = vst [vmem:[%s2337 + $0x250] sm:$0xff] %v2177
    %2413 = vst [vmem:[%s2337 + $0x258] sm:$0xff] %v2179
    %2414 = vst [vmem:[%s2337 + $0x260] sm:$0xff] %v2183
    %2415 = vst [vmem:[%s2337 + $0x268] sm:$0xff] %v2185
    %2416 = vst [vmem:[%s2337 + $0x270] sm:$0xff] %v2189
    %2417 = vst [vmem:[%s2337 + $0x278] sm:$0xff] %v2191
    %2418 = vst [vmem:[%s2337 + $0x280] sm:$0xff] %v2195
    %2419 = vst [vmem:[%s2337 + $0x288] sm:$0xff] %v2197
    %2420 = vst [vmem:[%s2337 + $0x290] sm:$0xff] %v2201
    %2421 = vst [vmem:[%s2337 + $0x298] sm:$0xff] %v2203
    %2422 = vst [vmem:[%s2337 + $0x2a0] sm:$0xff] %v2207
    %2423 = vst [vmem:[%s2337 + $0x2a8] sm:$0xff] %v2209
    %2424 = vst [vmem:[%s2337 + $0x2b0] sm:$0xff] %v2213
    %2425 = vst [vmem:[%s2337 + $0x2b8] sm:$0xff] %v2215
    %2426 = vst [vmem:[%s2337 + $0x2c0] sm:$0xff] %v2219
    %2427 = vst [vmem:[%s2337 + $0x2c8] sm:$0xff] %v2221
    %2428 = vst [vmem:[%s2337 + $0x2d0] sm:$0xff] %v2225
    %2429 = vst [vmem:[%s2337 + $0x2d8] sm:$0xff] %v2227
    %2430 = vst [vmem:[%s2337 + $0x2e0] sm:$0xff] %v2231
    %2431 = vst [vmem:[%s2337 + $0x2e8] sm:$0xff] %v2233
    %2432 = vst [vmem:[%s2337 + $0x2f0] sm:$0xff] %v2237
    %2433 = vst [vmem:[%s2337 + $0x2f8] sm:$0xff] %v2239
    %2434 = vst [vmem:[%s2337 + $0x300] sm:$0xff] %v2243
    %2435 = vst [vmem:[%s2337 + $0x308] sm:$0xff] %v2245
    %2436 = vst [vmem:[%s2337 + $0x310] sm:$0xff] %v2249
    %2437 = vst [vmem:[%s2337 + $0x318] sm:$0xff] %v2251
    %2438 = vst [vmem:[%s2337 + $0x320] sm:$0xff] %v2255
    %2439 = vst [vmem:[%s2337 + $0x328] sm:$0xff] %v2257
    %2440 = vst [vmem:[%s2337 + $0x330] sm:$0xff] %v2261
    %2441 = vst [vmem:[%s2337 + $0x338] sm:$0xff] %v2263
    %2442 = vst [vmem:[%s2337 + $0x340] sm:$0xff] %v2267
    %2443 = vst [vmem:[%s2337 + $0x348] sm:$0xff] %v2269
    %2444 = vst [vmem:[%s2337 + $0x350] sm:$0xff] %v2273
    %2445 = vst [vmem:[%s2337 + $0x358] sm:$0xff] %v2275
    %2446 = vst [vmem:[%s2337 + $0x360] sm:$0xff] %v2279
    %2447 = vst [vmem:[%s2337 + $0x368] sm:$0xff] %v2281
    %2448 = vst [vmem:[%s2337 + $0x370] sm:$0xff] %v2285
    %2449 = vst [vmem:[%s2337 + $0x378] sm:$0xff] %v2287
    %2450 = vst [vmem:[%s2337 + $0x380] sm:$0xff] %v2291
    %2451 = vst [vmem:[%s2337 + $0x388] sm:$0xff] %v2293
    %2452 = vst [vmem:[%s2337 + $0x390] sm:$0xff] %v2297
    %2453 = vst [vmem:[%s2337 + $0x398] sm:$0xff] %v2299
    %2454 = vst [vmem:[%s2337 + $0x3a0] sm:$0xff] %v2303
    %2455 = vst [vmem:[%s2337 + $0x3a8] sm:$0xff] %v2305
    %2456 = vst [vmem:[%s2337 + $0x3b0] sm:$0xff] %v2309
    %2457 = vst [vmem:[%s2337 + $0x3b8] sm:$0xff] %v2311
    %2458 = vst [vmem:[%s2337 + $0x3c0] sm:$0xff] %v2315
    %2459 = vst [vmem:[%s2337 + $0x3c8] sm:$0xff] %v2317
    %2460 = vst [vmem:[%s2337 + $0x3d0] sm:$0xff] %v2321
    %2461 = vst [vmem:[%s2337 + $0x3d8] sm:$0xff] %v2323
    %2462 = vst [vmem:[%s2337 + $0x3e0] sm:$0xff] %v2327
    %2463 = vst [vmem:[%s2337 + $0x3e8] sm:$0xff] %v2329
    %2464 = vst [vmem:[%s2337 + $0x3f0] sm:$0xff] %v2333
    %2465 = vst [vmem:[%s2337 + $0x3f8] sm:$0xff] %v2335
    // Predicated region
    $region34: #{tpu_custom_call.1} parent=1 // pred_check
      _
    $region35: #{tpu_custom_call.1} parent=1 // pred_check_branch
      %2467 = sbr.rel (0) target = $region37
    $region36: #{tpu_custom_call.1} parent=1 // pred_region
      %s2469 = ssub.s32 32768, 32768
      %2470 = vsyncadd [#allocation4], %s2469
      %s2471 = sshll.u32 [#allocation10], 4
      %s2472 = int_to_ptr.vmem [resolvable:$true] %s2471
      %2477 = dma.vmem_to_hbm [thread:$0]  %s2472, 32768, %s4, [#allocation4], 256, 256, 16
    $region37: #{tpu_custom_call.1} parent=1 // pred_fallthru
      _
    // Predicated region
    $region38: #{tpu_custom_call.1} parent=1 // pred_check
      _
    $region39: #{tpu_custom_call.1} parent=1 // pred_check_branch
      %2479 = sbr.rel (0) target = $region41
    $region40: #{tpu_custom_call.1} parent=1 // pred_region
      %2480 = dma.done [#allocation4], 32768
    $region41: #{tpu_custom_call.1} parent=1 // pred_fallthru
      _
    %2481 = vsyncpa [#allocation3], 1
    %2482 = vsyncpa [#allocation6], 1
    %2483 = vsyncpa [#allocation9], 1
    %2484 = vsyncpa [#allocation4], 1

</llo_original>
